<compile_context>
chip_gen: v5e
topology: v5e:2x2
jax: 0.10.0
libtpu: 0.0.40
codegen_flags: <defaults>
</compile_context>

<pallas_src>
import numpy as np

import jax
import jax.numpy as jnp
from jax.experimental import pallas as pl
from jax.experimental.pallas import tpu as pltpu


def _round_up(x, m):
    return ((x + m - 1) // m) * m


def _pad2(x, rows, cols):
    return jnp.pad(x, ((0, rows - x.shape[0]), (0, cols - x.shape[1])))


# ---------------------------------------------------------------------------
# Kernel
# ---------------------------------------------------------------------------
def ngcf_kernel(nk_ref, idx_ref, x_dst_ref, deg_ref, a_ref, x_src_ref,
                w1_ref, w2_ref, b1_ref, b12_ref, out_ref, acc_ref):
    i = pl.program_id(0)          # dst tile
    k = pl.program_id(1)          # position in this dst tile's nonzero-src-tile list

    @pl.when(k == 0)
    def _():
        acc_ref[...] = jnp.zeros_like(acc_ref)

    # Accumulate only for real (non-padded) schedule entries.  Padded entries
    # repeat the previous tile index, so their DMA is skipped by the pipeline.
    @pl.when(k < nk_ref[i])
    def _():
        acc_ref[...] += jnp.dot(a_ref[...], x_src_ref[...],
                                preferred_element_type=jnp.float32)

    @pl.when(k == pl.num_programs(1) - 1)
    def _():
        agg = acc_ref[...]                     # f32 (tm, d_in)
        xd = x_dst_ref[...]                    # f32 (tm, d_in)
        h = jnp.dot(xd + agg, w1_ref[...], preferred_element_type=jnp.float32)
        h = h + jnp.dot(agg * xd, w2_ref[...], preferred_element_type=jnp.float32)
        # folded bias: b1 + deg * (b1 + b2), computed on the VPU once per dst tile
        h = h + b1_ref[...] + deg_ref[...] * b12_ref[...]
        h = jnp.where(h > 0, h, 0.2 * h)       # LeakyReLU(0.2)
        # F.normalize(dim=1, p=2, eps=1e-12): 1/max(||h||,eps) == rsqrt(max(ssq,eps^2))
        ssq = jnp.sum(h * h, axis=1, keepdims=True)
        out_ref[...] = h * jax.lax.rsqrt(jnp.maximum(ssq, 1e-24))


def ngcf_half(nk, idx, x_dst, deg, a, x_src, w1, w2, b1, b12, *,
              tm, tk, vmem_limit_bytes):
    """One node-type's new 'h'.  a: [n_dst_p, n_src_p] bf16 (dst x src orientation)."""
    n_dst_p, d_in = x_dst.shape
    d_out = w1.shape[1]
    assert n_dst_p % tm == 0 and x_src.shape[0] % tk == 0
    grid = (n_dst_p // tm, idx.shape[1])       # (dst tiles, max nonzero src tiles)

    return pl.pallas_call(
        ngcf_kernel,
        out_shape=jax.ShapeDtypeStruct((n_dst_p, d_out), jnp.float32),
        grid_spec=pltpu.PrefetchScalarGridSpec(
            num_scalar_prefetch=2,             # nk [n_dst_tiles], idx [n_dst_tiles, max_nnz]
            grid=grid,
            in_specs=[
                pl.BlockSpec((tm, d_in), lambda i, k, nk, ix: (i, 0)),        # x_dst (f32)
                pl.BlockSpec((tm, 1), lambda i, k, nk, ix: (i, 0)),           # deg   (f32)
                pl.BlockSpec((tm, tk), lambda i, k, nk, ix: (i, ix[i, k])),   # A     (bf16)
                pl.BlockSpec((tk, d_in), lambda i, k, nk, ix: (ix[i, k], 0)), # x_src (bf16)
                pl.BlockSpec((d_in, d_out), lambda i, k, nk, ix: (0, 0)),     # W1    (f32)
                pl.BlockSpec((d_in, d_out), lambda i, k, nk, ix: (0, 0)),     # W2    (f32)
                pl.BlockSpec((1, d_out), lambda i, k, nk, ix: (0, 0)),        # b1    (f32)
                pl.BlockSpec((1, d_out), lambda i, k, nk, ix: (0, 0)),        # b1+b2 (f32)
            ],
            out_specs=pl.BlockSpec((tm, d_out), lambda i, k, nk, ix: (i, 0)),
            scratch_shapes=[pltpu.VMEM((tm, d_in), jnp.float32)],
        ),
        compiler_params=pltpu.CompilerParams(
            dimension_semantics=("parallel", "arbitrary"),
            vmem_limit_bytes=vmem_limit_bytes,
        ),
    )(nk, idx, x_dst, deg, a, x_src, w1, w2, b1, b12)


# ---------------------------------------------------------------------------
# Tiling / VMEM heuristics
# ---------------------------------------------------------------------------
def _vmem_capacity_bytes():
    try:
        cap = getattr(pltpu.get_tpu_info(), "vmem_capacity_bytes", None)
        if cap:
            return int(cap)
    except Exception:
        pass
    return 64 * 1024 * 1024  # conservative fallback (v7x per-TC physical VMEM)


def _half_footprint_bytes(tm, tk, d_in, d_out):
    a = 2 * tm * tk * 2                    # A tile, bf16, double-buffered
    xd = 2 * tm * d_in * 4                 # x_dst tile, f32
    xs = 2 * tk * d_in * 2                 # x_src tile, bf16
    dg = 2 * tm * 128 * 4                  # deg column (lane-padded)
    w = 2 * 2 * d_in * d_out * 4           # W1 + W2, f32
    b = 2 * 2 * 8 * d_out * 4              # b1 + b12 (sublane-padded)
    out = 2 * tm * d_out * 4               # output tile, f32
    acc = tm * d_in * 4                    # accumulator scratch
    return a + xd + xs + dg + w + b + out + acc


def _pick_tiles(n_user, n_item, d_in, d_out, tile, vmem_budget):
    tile = max(128, _round_up(int(tile), 128))

    def initial(n):
        n128 = _round_up(max(int(n), 1), 128)
        best, c = 128, 128
        while c <= min(tile, n128):
            # keep >= 2 dst tiles (megacore) whenever the node count allows it
            if c == 128 or -(-n128 // c) >= 2:
                best = c
            c *= 2
        return best

    tu, ti = initial(n_user), initial(n_item)
    while (max(_half_footprint_bytes(tu, ti, d_in, d_out),
               _half_footprint_bytes(ti, tu, d_in, d_out)) > vmem_budget
           and (tu > 128 or ti > 128)):
        if tu >= ti and tu > 128:
            tu //= 2
        else:
            ti //= 2
    return tu, ti


# ---------------------------------------------------------------------------
# One-time (cacheable) graph preprocessing
# ---------------------------------------------------------------------------
def _tile_mask(a_pad, t_rows, t_cols):
    r, c = a_pad.shape
    m = a_pad.reshape(r // t_rows, t_rows, c // t_cols, t_cols)
    return (m != 0.0).any(axis=(1, 3))


def _schedule(mask):
    """Per dst tile: count of nonzero src tiles + compacted, repeat-padded indices."""
    n_dst = mask.shape[0]
    counts = mask.sum(axis=1).astype(np.int32)
    max_nnz = max(int(counts.max()), 1) if n_dst else 1
    idx = np.zeros((n_dst, max_nnz), dtype=np.int32)
    for r in range(n_dst):
        nz = np.flatnonzero(mask[r]).astype(np.int32)
        if nz.size:
            idx[r, :nz.size] = nz
            idx[r, nz.size:] = nz[-1]   # repeat last index -> pipeline skips the re-DMA
    return counts, idx


def prepare_graph(a_norm_user_item, *, t_user, t_item):
    """Pad / cast A (both orientations), degrees, and block-sparse schedules.

    For static graphs call this once and pass the result to ngcf_layer_our3(graph=...).
    """
    n_user, n_item = a_norm_user_item.shape
    n_user_p = _round_up(n_user, t_user)
    n_item_p = _round_up(n_item, t_item)

    a_np = np.zeros((n_user_p, n_item_p), np.float32)
    a_np[:n_user, :n_item] = np.asarray(jax.device_get(a_norm_user_item), dtype=np.float32)

    deg_u = a_np.sum(axis=1, keepdims=True)          # [n_user_p, 1]
    deg_i = a_np.sum(axis=0)[:, None]                # [n_item_p, 1]

    mask = _tile_mask(a_np, t_user, t_item)          # [user_tiles, item_tiles]
    nk_u, idx_u = _schedule(mask)                    # user half reduces over item tiles
    nk_i, idx_i = _schedule(mask.T)                  # item half reduces over user tiles

    return dict(
        t_user=t_user, t_item=t_item, n_user_p=n_user_p, n_item_p=n_item_p,
        a_bf=jnp.asarray(a_np, dtype=jnp.bfloat16),
        a_t_bf=jnp.asarray(np.ascontiguousarray(a_np.T), dtype=jnp.bfloat16),
        deg_u=jnp.asarray(deg_u, dtype=jnp.float32),
        deg_i=jnp.asarray(deg_i, dtype=jnp.float32),
        nk_u=jnp.asarray(nk_u), idx_u=jnp.asarray(idx_u),
        nk_i=jnp.asarray(nk_i), idx_i=jnp.asarray(idx_i),
    )


# ---------------------------------------------------------------------------
# Full layer
# ---------------------------------------------------------------------------
def ngcf_layer_our3(feat_user, feat_item, a_norm_user_item, params, *,
                    tile=2048, graph=None):
    w1, b1, w2, b2 = params["w1"], params["b1"], params["w2"], params["b2"]
    n_user, in_size = feat_user.shape
    n_item = feat_item.shape[0]
    out_size = w1.shape[1]

    d_in = _round_up(in_size, 128)
    d_out = _round_up(out_size, 128)

    vmem_budget = int(_vmem_capacity_bytes() * 3 // 4)   # ~96 MiB v5e/v6e, ~48 MiB v7x

    if graph is None:
        t_user, t_item = _pick_tiles(n_user, n_item, d_in, d_out, tile, vmem_budget)
        graph = prepare_graph(a_norm_user_item, t_user=t_user, t_item=t_item)
    t_user, t_item = graph["t_user"], graph["t_item"]
    n_user_p, n_item_p = graph["n_user_p"], graph["n_item_p"]

    need = max(_half_footprint_bytes(t_user, t_item, d_in, d_out),
               _half_footprint_bytes(t_item, t_user, d_in, d_out))
    vmem_limit = min(vmem_budget, max(2 * need, 32 * 1024 * 1024))

    # Features: f32 (dst / epilogue) + bf16 (src of the streamed A matmul).
    xu = _pad2(feat_user.astype(jnp.float32), n_user_p, d_in)
    xi = _pad2(feat_item.astype(jnp.float32), n_item_p, d_in)
    xu_bf = xu.astype(jnp.bfloat16)
    xi_bf = xi.astype(jnp.bfloat16)

    # Weights / biases, zero-padded (padded rows/cols contribute nothing).
    w1p = _pad2(w1.astype(jnp.float32), d_in, d_out)
    w2p = _pad2(w2.astype(jnp.float32), d_in, d_out)
    b1p = _pad2(b1.astype(jnp.float32).reshape(1, -1), 1, d_out)
    b2p = _pad2(b2.astype(jnp.float32).reshape(1, -1), 1, d_out)
    b12p = b1p + b2p

    h_user = ngcf_half(graph["nk_u"], graph["idx_u"], xu, graph["deg_u"],
                       graph["a_bf"], xi_bf, w1p, w2p, b1p, b12p,
                       tm=t_user, tk=t_item, vmem_limit_bytes=vmem_limit)
    h_item = ngcf_half(graph["nk_i"], graph["idx_i"], xi, graph["deg_i"],
                       graph["a_t_bf"], xu_bf, w1p, w2p, b1p, b12p,
                       tm=t_item, tk=t_user, vmem_limit_bytes=vmem_limit)
    return {"user": h_user[:n_user, :out_size], "item": h_item[:n_item, :out_size]}


# ---------------------------------------------------------------------------
# Pure-JAX reference + demo inputs
# ---------------------------------------------------------------------------
def ngcf_reference(feat_user, feat_item, a_norm, params):
    """Pure-JAX f32 reference following the original (un-refactored) torch math."""
    w1, b1, w2, b2 = params["w1"], params["b1"], params["w2"], params["b2"]

    def half(x_dst, x_src, a):
        t1 = x_dst @ w1 + b1                               # copy_u_sum(self, W1 x_dst)
        t2 = a @ (x_src @ w1 + b1)                         # u_mul_e_sum(W1 x_src, norm)
        deg = jnp.sum(a, axis=1, keepdims=True)
        t3 = ((a @ x_src) * x_dst) @ w2 + deg * b2         # copy_e_sum(norm * W2(u*v))
        h = t1 + t2 + t3
        h = jnp.where(h > 0, h, 0.2 * h)
        nrm = jnp.sqrt(jnp.sum(h * h, axis=1, keepdims=True))
        return h / jnp.maximum(nrm, 1e-12)

    return {"user": half(feat_user, feat_item, a_norm),
            "item": half(feat_item, feat_user, a_norm.T)}


def make_params(key, in_size, out_size):
    # torch W.weight is [out, in], xavier_uniform bound = sqrt(6/(in+out)); store transposed.
    bound = (6.0 / (in_size + out_size)) ** 0.5
    k1, k2, k3, k4 = jax.random.split(key, 4)
    w1 = jax.random.uniform(k1, (in_size, out_size), jnp.float32, -bound, bound)
    w2 = jax.random.uniform(k2, (in_size, out_size), jnp.float32, -bound, bound)
    # Module init is zeros; use small nonzero biases here to exercise the folded-bias path.
    b1 = 0.05 * jax.random.normal(k3, (1, out_size), jnp.float32)
    b2 = 0.05 * jax.random.normal(k4, (1, out_size), jnp.float32)
    return {"w1": w1, "b1": b1, "w2": w2, "b2": b2}


def make_graph(key, n_user, n_item):
    adj = jax.random.bernoulli(key, 0.2, (n_user, n_item)).astype(jnp.float32)
    # Block structure (first-half users <-> first-half items) so some adjacency
    # tiles are all-zero and the block-sparse schedule actually skips work.
    u = jnp.arange(n_user)[:, None]
    it = jnp.arange(n_item)[None, :]
    same_half = ((2 * u >= n_user) == (2 * it >= n_item)).astype(jnp.float32)
    adj = adj * same_half
    # Guarantee every node has at least one edge (inside its own half).
    hu, hi = n_user // 2, n_item // 2
    u_idx = jnp.arange(n_user)
    adj = adj.at[u_idx, jnp.where(u_idx < hu, u_idx % hi, hi + u_idx % (n_item - hi))].set(1.0)
    i_idx = jnp.arange(n_item)
    adj = adj.at[jnp.where(i_idx < hi, i_idx % hu, hu + i_idx % (n_user - hu)), i_idx].set(1.0)
    # One cross-block edge so ragged schedules (k >= nnz padding) are exercised too.
    adj = adj.at[0, n_item - 1].set(1.0)
    deg_u = jnp.sum(adj, axis=1, keepdims=True)
    deg_i = jnp.sum(adj, axis=0, keepdims=True)
    return adj / jnp.sqrt(deg_u * deg_i)                   # NGCF symmetric per-edge norm


if __name__ == "__main__":
    in_size, out_size = 48, 64
    n_user, n_item = 256, 512

    key = jax.random.PRNGKey(0)
    k_feat_u, k_feat_i, k_params, k_graph = jax.random.split(key, 4)

    feat_user = jax.random.normal(k_feat_u, (n_user, in_size), jnp.float32)
    feat_item = jax.random.normal(k_feat_i, (n_item, in_size), jnp.float32)
    params = make_params(k_params, in_size, out_size)
    a_norm = make_graph(k_graph, n_user, n_item)

    out = ngcf_layer_our3(feat_user, feat_item, a_norm, params)
    jax.block_until_ready(out)

    assert out["user"].shape == (n_user, out_size)
    assert out["item"].shape == (n_item, out_size)

    # Correctness vs pure-JAX f32 reference (loose tolerance: A/x_src are bf16 in-kernel).
    ref = ngcf_reference(feat_user, feat_item, a_norm, params)
    err_u = float(jnp.max(jnp.abs(out["user"] - ref["user"])))
    err_i = float(jnp.max(jnp.abs(out["item"] - ref["item"])))
    assert err_u < 5e-2 and err_i < 5e-2, (err_u, err_i)

    print("KERNEL_OK")
</pallas_src>

<mosaic_0001>
module attributes {stable_mosaic.version = 11 : i64} {
  func.func @ngcf_kernel(%arg0: i32, %arg1: i32, %arg2: memref<2xi32, #tpu.memory_space<smem>>, %arg3: memref<2x2xi32, #tpu.memory_space<smem>>, %arg4: memref<128x128xf32, #tpu.memory_space<vmem>>, %arg5: memref<128x1xf32, #tpu.memory_space<vmem>>, %arg6: memref<128x256xbf16, #tpu.memory_space<vmem>>, %arg7: memref<256x128xbf16, #tpu.memory_space<vmem>>, %arg8: memref<128x128xf32, #tpu.memory_space<vmem>>, %arg9: memref<128x128xf32, #tpu.memory_space<vmem>>, %arg10: memref<1x128xf32, #tpu.memory_space<vmem>>, %arg11: memref<1x128xf32, #tpu.memory_space<vmem>>, %arg12: memref<128x128xf32, #tpu.memory_space<vmem>>, %arg13: memref<128x128xf32, #tpu.memory_space<vmem>>) attributes {dimension_semantics = [#tpu.dimension_semantics<parallel>, #tpu.dimension_semantics<arbitrary>], iteration_bounds = array<i64: 2, 2>, scalar_prefetch = 2 : i64, scratch_operands = 1 : i64, tpu.core_type = #tpu.core_type<tc>, window_params = [{transform_indices = @transform_0, window_bounds = array<i64: 128, 128>}, {transform_indices = @transform_1, window_bounds = array<i64: 128, 1>}, {transform_indices = @transform_2, window_bounds = array<i64: 128, 256>}, {transform_indices = @transform_3, window_bounds = array<i64: 256, 128>}, {pipeline_mode = #tpu.pipeline_mode<synchronous>, transform_indices = @transform_4, window_bounds = array<i64: 128, 128>}, {pipeline_mode = #tpu.pipeline_mode<synchronous>, transform_indices = @transform_5, window_bounds = array<i64: 128, 128>}, {pipeline_mode = #tpu.pipeline_mode<synchronous>, transform_indices = @transform_6, window_bounds = array<i64: 1, 128>}, {pipeline_mode = #tpu.pipeline_mode<synchronous>, transform_indices = @transform_7, window_bounds = array<i64: 1, 128>}, {transform_indices = @transform_8, window_bounds = array<i64: 128, 128>}]} {
    %c0_i32 = arith.constant 0 : i32
    %0 = arith.cmpi eq, %arg1, %c0_i32 : i32
    %1 = arith.extui %0 : i1 to i32
    %c0_i32_0 = arith.constant 0 : i32
    %2 = arith.cmpi ne, %1, %c0_i32_0 : i32
    scf.if %2 {
      %cst = arith.constant 0.000000e+00 : f32
      %11 = vector.broadcast %cst : f32 to vector<128x128xf32>
      %c0 = arith.constant 0 : index
      %c0_3 = arith.constant 0 : index
      %12 = vector.load %arg13[%c0, %c0_3] : memref<128x128xf32, #tpu.memory_space<vmem>>, vector<128x128xf32>
      tpu.vector_store %arg13[%c0, %c0_3], %11 {strides = array<i32>} : memref<128x128xf32, #tpu.memory_space<vmem>>, vector<128x128xf32>,
    } else {
    }
    %3 = arith.index_cast %arg0 : i32 to index
    %4 = memref.load %arg2[%3] : memref<2xi32, #tpu.memory_space<smem>>
    %5 = arith.cmpi slt, %arg1, %4 : i32
    %6 = arith.extui %5 : i1 to i32
    %c0_i32_1 = arith.constant 0 : i32
    %7 = arith.cmpi ne, %6, %c0_i32_1 : i32
    scf.if %7 {
      %c0 = arith.constant 0 : index
      %c0_3 = arith.constant 0 : index
      %11 = vector.load %arg13[%c0, %c0_3] : memref<128x128xf32, #tpu.memory_space<vmem>>, vector<128x128xf32>
      %c0_4 = arith.constant 0 : index
      %c0_5 = arith.constant 0 : index
      %12 = vector.load %arg6[%c0_4, %c0_5] : memref<128x256xbf16, #tpu.memory_space<vmem>>, vector<128x256xbf16>
      %c0_6 = arith.constant 0 : index
      %c0_7 = arith.constant 0 : index
      %13 = vector.load %arg7[%c0_6, %c0_7] : memref<256x128xbf16, #tpu.memory_space<vmem>>, vector<256x128xbf16>
      %cst = arith.constant dense<0.000000e+00> : vector<128x128xf32>
      %14 = tpu.matmul %12, %13, %cst {dimension_numbers = #tpu.dot_dimension_numbers<[1], [0], [0], [1], [0, 0, 1, 1], [], []>} : vector<128x256xbf16>, vector<256x128xbf16>, vector<128x128xf32> -> vector<128x128xf32>
      %15 = arith.addf %11, %14 : vector<128x128xf32>
      %c0_8 = arith.constant 0 : index
      %c0_9 = arith.constant 0 : index
      %16 = vector.load %arg13[%c0_8, %c0_9] : memref<128x128xf32, #tpu.memory_space<vmem>>, vector<128x128xf32>
      tpu.vector_store %arg13[%c0_8, %c0_9], %15 {strides = array<i32>} : memref<128x128xf32, #tpu.memory_space<vmem>>, vector<128x128xf32>,
    } else {
    }
    %c1_i32 = arith.constant 1 : i32
    %8 = arith.cmpi eq, %arg1, %c1_i32 : i32
    %9 = arith.extui %8 : i1 to i32
    %c0_i32_2 = arith.constant 0 : i32
    %10 = arith.cmpi ne, %9, %c0_i32_2 : i32
    scf.if %10 {
      %c0 = arith.constant 0 : index
      %c0_3 = arith.constant 0 : index
      %11 = vector.load %arg13[%c0, %c0_3] : memref<128x128xf32, #tpu.memory_space<vmem>>, vector<128x128xf32>
      %c0_4 = arith.constant 0 : index
      %c0_5 = arith.constant 0 : index
      %12 = vector.load %arg4[%c0_4, %c0_5] : memref<128x128xf32, #tpu.memory_space<vmem>>, vector<128x128xf32>
      %13 = arith.addf %12, %11 : vector<128x128xf32>
      %c0_6 = arith.constant 0 : index
      %c0_7 = arith.constant 0 : index
      %14 = vector.load %arg8[%c0_6, %c0_7] : memref<128x128xf32, #tpu.memory_space<vmem>>, vector<128x128xf32>
      %cst = arith.constant dense<0.000000e+00> : vector<128x128xf32>
      %15 = tpu.matmul %13, %14, %cst {dimension_numbers = #tpu.dot_dimension_numbers<[1], [0], [0], [1], [0, 0, 1, 1], [], []>} : vector<128x128xf32>, vector<128x128xf32>, vector<128x128xf32> -> vector<128x128xf32>
      %16 = arith.mulf %11, %12 : vector<128x128xf32>
      %c0_8 = arith.constant 0 : index
      %c0_9 = arith.constant 0 : index
      %17 = vector.load %arg9[%c0_8, %c0_9] : memref<128x128xf32, #tpu.memory_space<vmem>>, vector<128x128xf32>
      %cst_10 = arith.constant dense<0.000000e+00> : vector<128x128xf32>
      %18 = tpu.matmul %16, %17, %cst_10 {dimension_numbers = #tpu.dot_dimension_numbers<[1], [0], [0], [1], [0, 0, 1, 1], [], []>} : vector<128x128xf32>, vector<128x128xf32>, vector<128x128xf32> -> vector<128x128xf32>
      %19 = arith.addf %15, %18 : vector<128x128xf32>
      %c0_11 = arith.constant 0 : index
      %c0_12 = arith.constant 0 : index
      %20 = vector.load %arg10[%c0_11, %c0_12] : memref<1x128xf32, #tpu.memory_space<vmem>>, vector<1x128xf32>
      %21 = vector.broadcast %20 : vector<1x128xf32> to vector<128x128xf32>
      %22 = arith.addf %19, %21 : vector<128x128xf32>
      %c0_13 = arith.constant 0 : index
      %c0_14 = arith.constant 0 : index
      %23 = vector.load %arg5[%c0_13, %c0_14] : memref<128x1xf32, #tpu.memory_space<vmem>>, vector<128x1xf32>
      %c0_15 = arith.constant 0 : index
      %c0_16 = arith.constant 0 : index
      %24 = vector.load %arg11[%c0_15, %c0_16] : memref<1x128xf32, #tpu.memory_space<vmem>>, vector<1x128xf32>
      %25 = vector.broadcast %23 : vector<128x1xf32> to vector<128x128xf32>
      %26 = vector.broadcast %24 : vector<1x128xf32> to vector<128x128xf32>
      %27 = arith.mulf %25, %26 : vector<128x128xf32>
      %28 = arith.addf %22, %27 : vector<128x128xf32>
      %cst_17 = arith.constant 0.000000e+00 : f32
      %29 = vector.broadcast %cst_17 : f32 to vector<128x128xf32>
      %30 = arith.cmpf ogt, %28, %29 : vector<128x128xf32>
      %cst_18 = arith.constant 2.000000e-01 : f32
      %31 = vector.broadcast %cst_18 : f32 to vector<128x128xf32>
      %32 = arith.mulf %31, %28 : vector<128x128xf32>
      %33 = arith.select %30, %28, %32 : vector<128x128xi1>, vector<128x128xf32>
      %34 = arith.mulf %33, %33 : vector<128x128xf32>
      %cst_19 = arith.constant dense<0.000000e+00> : vector<128xf32>
      %35 = vector.multi_reduction <add>, %34, %cst_19 [1] : vector<128x128xf32> to vector<128xf32>
      %36 = vector.shape_cast %35 : vector<128xf32> to vector<128x1xf32>
      %cst_20 = arith.constant 1.000000e-24 : f32
      %37 = vector.broadcast %cst_20 : f32 to vector<128x1xf32>
      %38 = arith.maximumf %36, %37 : vector<128x1xf32>
      %39 = math.rsqrt %38 : vector<128x1xf32>
      %40 = vector.broadcast %39 : vector<128x1xf32> to vector<128x128xf32>
      %41 = arith.mulf %33, %40 : vector<128x128xf32>
      %c0_21 = arith.constant 0 : index
      %c0_22 = arith.constant 0 : index
      %42 = vector.load %arg12[%c0_21, %c0_22] : memref<128x128xf32, #tpu.memory_space<vmem>>, vector<128x128xf32>
      tpu.vector_store %arg12[%c0_21, %c0_22], %41 {strides = array<i32>} : memref<128x128xf32, #tpu.memory_space<vmem>>, vector<128x128xf32>,
    } else {
    }
    return
  }
  func.func @transform_0(%arg0: i32, %arg1: i32, %arg2: memref<2xi32, #tpu.memory_space<smem>>, %arg3: memref<2x2xi32, #tpu.memory_space<smem>>) -> (i32, i32) {
    %c0_i32 = arith.constant 0 : i32
    %c0_i32_0 = arith.constant 0 : i32
    return %arg0, %c0_i32 : i32, i32
  }
  func.func @transform_1(%arg0: i32, %arg1: i32, %arg2: memref<2xi32, #tpu.memory_space<smem>>, %arg3: memref<2x2xi32, #tpu.memory_space<smem>>) -> (i32, i32) {
    %c0_i32 = arith.constant 0 : i32
    %c0_i32_0 = arith.constant 0 : i32
    return %arg0, %c0_i32 : i32, i32
  }
  func.func @transform_2(%arg0: i32, %arg1: i32, %arg2: memref<2xi32, #tpu.memory_space<smem>>, %arg3: memref<2x2xi32, #tpu.memory_space<smem>>) -> (i32, i32) {
    %0 = arith.index_cast %arg0 : i32 to index
    %1 = arith.index_cast %arg1 : i32 to index
    %2 = memref.load %arg3[%0, %1] : memref<2x2xi32, #tpu.memory_space<smem>>
    %c0_i32 = arith.constant 0 : i32
    return %arg0, %2 : i32, i32
  }
  func.func @transform_3(%arg0: i32, %arg1: i32, %arg2: memref<2xi32, #tpu.memory_space<smem>>, %arg3: memref<2x2xi32, #tpu.memory_space<smem>>) -> (i32, i32) {
    %0 = arith.index_cast %arg0 : i32 to index
    %1 = arith.index_cast %arg1 : i32 to index
    %2 = memref.load %arg3[%0, %1] : memref<2x2xi32, #tpu.memory_space<smem>>
    %c0_i32 = arith.constant 0 : i32
    %c0_i32_0 = arith.constant 0 : i32
    return %2, %c0_i32 : i32, i32
  }
  func.func @transform_4(%arg0: i32, %arg1: i32, %arg2: memref<2xi32, #tpu.memory_space<smem>>, %arg3: memref<2x2xi32, #tpu.memory_space<smem>>) -> (i32, i32) {
    %c0_i32 = arith.constant 0 : i32
    %c0_i32_0 = arith.constant 0 : i32
    %c0_i32_1 = arith.constant 0 : i32
    return %c0_i32, %c0_i32_0 : i32, i32
  }
  func.func @transform_5(%arg0: i32, %arg1: i32, %arg2: memref<2xi32, #tpu.memory_space<smem>>, %arg3: memref<2x2xi32, #tpu.memory_space<smem>>) -> (i32, i32) {
    %c0_i32 = arith.constant 0 : i32
    %c0_i32_0 = arith.constant 0 : i32
    %c0_i32_1 = arith.constant 0 : i32
    return %c0_i32, %c0_i32_0 : i32, i32
  }
  func.func @transform_6(%arg0: i32, %arg1: i32, %arg2: memref<2xi32, #tpu.memory_space<smem>>, %arg3: memref<2x2xi32, #tpu.memory_space<smem>>) -> (i32, i32) {
    %c0_i32 = arith.constant 0 : i32
    %c0_i32_0 = arith.constant 0 : i32
    %c0_i32_1 = arith.constant 0 : i32
    return %c0_i32, %c0_i32_0 : i32, i32
  }
  func.func @transform_7(%arg0: i32, %arg1: i32, %arg2: memref<2xi32, #tpu.memory_space<smem>>, %arg3: memref<2x2xi32, #tpu.memory_space<smem>>) -> (i32, i32) {
    %c0_i32 = arith.constant 0 : i32
    %c0_i32_0 = arith.constant 0 : i32
    %c0_i32_1 = arith.constant 0 : i32
    return %c0_i32, %c0_i32_0 : i32, i32
  }
  func.func @transform_8(%arg0: i32, %arg1: i32, %arg2: memref<2xi32, #tpu.memory_space<smem>>, %arg3: memref<2x2xi32, #tpu.memory_space<smem>>) -> (i32, i32) {
    %c0_i32 = arith.constant 0 : i32
    %c0_i32_0 = arith.constant 0 : i32
    return %arg0, %c0_i32 : i32, i32
  }
}

</mosaic_0001>

<llo_original>
// kernel: tpu_custom_call.1
$region0: #{tpu_custom_call.1}
  #allocation0 [shape = 'u32[]', space=smem, size = 0x4, offset = 0x4, fixed_abs, tag = 'smem constant byte address 0x4 - core index']
  #allocation1 [shape = 'u32[72,128]{1,0:T(1,128)}', space=vmem, size = 0x9000, scoped, tag = 'internal scratch']
  #allocation2 [shape = 'f32[128,128]{1,0:T(8,128)}', space=vmem, size = 0x10000, scoped, tag = 'scratch operand']
  #allocation3 [shape = 's32[1]{0}', space=sflag, size = 0x4, scoped, tag = 'scoped memory for tpu_custom_call.1']
  #allocation4 [shape = 'u8[512]{0}', space=smem, size = 0x200, scoped, tag = 'prefetched SMEM operand 0']
  #allocation5 [shape = 'u8[1024]{0}', space=smem, size = 0x400, scoped, tag = 'prefetched SMEM operand 1']
  %s0 = inlined_call_operand.hbm [shape: s32[2], index: 0, kind: input, shape index: {}]
  %s1 = inlined_call_operand.vmem [shape: s32[2,2], index: 1, kind: input, shape index: {}]
  %s2 = inlined_call_operand.vmem [shape: f32[256,128], index: 2, kind: input, shape index: {}]
  %s3 = inlined_call_operand.vmem [shape: f32[256,1], index: 3, kind: input, shape index: {}]
  %s4 = inlined_call_operand.hbm [shape: bf16[256,512], index: 4, kind: input, shape index: {}]
  %s5 = inlined_call_operand.hbm [shape: bf16[512,128], index: 5, kind: input, shape index: {}]
  %s6 = inlined_call_operand.hbm [shape: f32[128,128], index: 6, kind: input, shape index: {}]
  %s7 = inlined_call_operand.hbm [shape: f32[128,128], index: 7, kind: input, shape index: {}]
  %s8 = inlined_call_operand.vmem [shape: f32[1,128], index: 8, kind: input, shape index: {}]
  %s9 = inlined_call_operand.vmem [shape: f32[1,128], index: 9, kind: input, shape index: {}]
  %s10 = inlined_call_operand.hbm [shape: f32[256,128], index: 10, kind: output, shape index: {}]
  %s11 = sld [smem:[#allocation0]]
  $region93: #{tpu_custom_call.1} parent=0
    _
  %s13 = ssub.s32 1, %s11
  %s14 = scalar_select 0, %s13, %s11
  %s16 = sshll.u32 %s0, 4
  %s17 = int_to_ptr.hbm [resolvable:$true] %s16
  %19 = dma.hbm_to_smem %s17, 16, [#allocation4], [#allocation3]
  %s21 = sshll.u32 %s1, 4
  %s22 = int_to_ptr.vmem [resolvable:$true] %s21
  %24 = dma.vmem_to_smem %s22, 32, [#allocation5], [#allocation3]
  %26 = dma.done [#allocation3], 48
  %27 = sfence
  $region1: #{tpu_custom_call.1} parent=0
    #allocation6 [shape = 'u8[131072]{0}', space=vmem, size = 0x20000, scoped, tag = 'input window, operand 4']
    #allocation7 [shape = 's32[2]{0}', space=sflag, size = 0x8, scoped, tag = 'scoped memory for tpu_custom_call.1']
    #allocation8 [shape = 's32[2]{0}', space=sflag, size = 0x8, scoped, tag = 'scoped memory for tpu_custom_call.1']
    #allocation9 [shape = 'u8[131072]{0}', space=vmem, size = 0x20000, scoped, tag = 'input window, operand 5']
    #allocation10 [shape = 's32[2]{0}', space=sflag, size = 0x8, scoped, tag = 'scoped memory for tpu_custom_call.1']
    #allocation11 [shape = 'u8[65536]{0}', space=vmem, size = 0x10000, scoped, tag = 'input window, operand 6, single buffered']
    #allocation12 [shape = 'u8[65536]{0}', space=vmem, size = 0x10000, scoped, tag = 'input window, operand 7, single buffered']
    #allocation13 [shape = 's32[1]{0}', space=sflag, size = 0x4, scoped, tag = 'scoped memory for tpu_custom_call.1']
    #allocation14 [shape = 'u8[131072]{0}', space=vmem, size = 0x20000, scoped, tag = 'output window, operand 0']
    %28 = vsyncpa [#allocation7], 0
    %s29 = scalar_lea.sflag [#allocation7], 1
    %30 = vsyncpa %s29, 0
    %31 = vsyncpa [#allocation10], 0
    %s32 = scalar_lea.sflag [#allocation10], 1
    %33 = vsyncpa %s32, 0
    %34 = vsyncpa [#allocation13], 0
    %35 = vsyncpa [#allocation8], 0
    %s36 = scalar_lea.sflag [#allocation8], 1
    %37 = vsyncpa %s36, 0
    loop: start=0, step=1, limit=6
    $region2: #{tpu_custom_call.1} parent=1 // loop_pre_header
      _
    $region3: #{tpu_custom_call.1} parent=1 // loop_header
      %s39 = sphi 0, %s43
      %p40 = scmp.ge.s32.totalorder %s39, 6
      %s46 = sphi 0, %s58
      %s47 = sphi 0, %s54
      %s48 = sphi 0, %s46
      %s49 = sphi 0, %s47
      %s50 = sphi 0, %s48
      %s51 = sphi 0, %s49
      %s61 = sphi 0, %s63
      %s64 = sphi 0, %s61
      %s65 = sphi 0, %s64
      %s81 = sphi 0, %s65
      %s87 = sphi 0, %s89
      %s90 = sphi 0, %s87
      %s91 = sphi 0, %s90
      %s107 = sphi 0, %s91
      %s131 = sphi 0, %s133
      %s134 = sphi 0, %s131
      %s135 = sphi 0, %s134
      %s151 = sphi 0, %s135
      %s173 = sphi 0, %s175
      %s176 = sphi 0, %s173
      %s177 = sphi 0, %s176
      %s193 = sphi 0, %s177
      %s197 = sphi 0, %s197
      %s199 = sphi 0, %s197
      %s200 = sphi 0, %s199
      %s214 = sphi 0, %s200
      %s218 = sphi 0, %s218
      %s220 = sphi 0, %s218
      %s221 = sphi 0, %s220
      %s235 = sphi 0, %s221
      %s239 = sphi 0, %s239
      %s241 = sphi 0, %s239
      %s242 = sphi 0, %s241
      %s256 = sphi 0, %s242
      %s260 = sphi 0, %s260
      %s262 = sphi 0, %s260
      %s263 = sphi 0, %s262
      %s277 = sphi 0, %s263
      %s283 = sphi 0, %s285
      %s286 = sphi 0, %s283
      %s287 = sphi 0, %s286
      %s303 = sphi 0, %s287
    $region4: #{tpu_custom_call.1} parent=1 // loop_header_branch
      %42 = sbr.rel (%p40) target = $region8
    $region5: #{tpu_custom_call.1} parent=1 // loop_body
      %s44 = ssub.s32 %s39, 1
      %s45 = ssub.s32 %s39, 2
      %s52 = sadd.s32 1, %s47
      %p53 = scmp.ge.s32.totalorder %s52, 2
      %s54 = scalar_select %p53, 0, %s52
      %s55 = sadd.s32 1, %s46
      %s56 = scalar_select %p53, %s55, %s46
      %p57 = scmp.ge.s32.totalorder %s56, 2
      %s58 = scalar_select %p57, 0, %s56
      %s59 = ssub.s32 %s46, %s58
      %p60 = scmp.eq.s32.totalorder %s59, 0
      %s62 = sadd.s32 %s61, 1
      %s63 = scalar_select %p60, %s61, %s62
      %p66 = pneg %p60
      %p67 = scmp.eq.s32.totalorder %s39, 3
      %p68 = por %p66, %p67
      %p69 = scmp.ne.s32.totalorder %s61, %s64
      %p70 = scmp.eq.s32.totalorder %s39, 0
      %p71 = por %p69, %p70
      %p72 = scmp.ne.s32.totalorder %s61, %s64
      %p73 = scmp.eq.s32.totalorder %s44, 3
      %p74 = por %p72, %p73
      %p75 = scmp.ne.s32.totalorder %s64, %s65
      %p76 = scmp.eq.s32.totalorder %s44, 0
      %p77 = por %p75, %p76
      %p78 = scmp.ne.s32.totalorder %s64, %s65
      %p79 = scmp.eq.s32.totalorder %s45, 3
      %p80 = por %p78, %p79
      %p82 = scmp.ne.s32.totalorder %s65, %s81
      %p83 = scmp.eq.s32.totalorder %s45, 0
      %p84 = por %p82, %p83
      %s85 = ssub.s32 %s46, %s58
      %p86 = scmp.eq.s32.totalorder %s85, 0
      %s88 = sadd.s32 %s87, 1
      %s89 = scalar_select %p86, %s87, %s88
      %p92 = pneg %p86
      %p93 = scmp.eq.s32.totalorder %s39, 3
      %p94 = por %p92, %p93
      %p95 = scmp.ne.s32.totalorder %s87, %s90
      %p96 = scmp.eq.s32.totalorder %s39, 0
      %p97 = por %p95, %p96
      %p98 = scmp.ne.s32.totalorder %s87, %s90
      %p99 = scmp.eq.s32.totalorder %s44, 3
      %p100 = por %p98, %p99
      %p101 = scmp.ne.s32.totalorder %s90, %s91
      %p102 = scmp.eq.s32.totalorder %s44, 0
      %p103 = por %p101, %p102
      %p104 = scmp.ne.s32.totalorder %s90, %s91
      %p105 = scmp.eq.s32.totalorder %s45, 3
      %p106 = por %p104, %p105
      %p108 = scmp.ne.s32.totalorder %s91, %s107
      %p109 = scmp.eq.s32.totalorder %s45, 0
      %p110 = por %p108, %p109
      %s111 = sshra.s32 %s47, 7
      %s112 = sand.u32 %s47, 127
      %s113 = sadd.s32 %s111, %s46
      %s114 = smul.u32 %s113, 128
      %s115 = sshra.s32 %s47, 7
      %s116 = sand.u32 %s47, 127
      %s117 = sadd.s32 %s114, %s116
      %s118 = sld [smem:[#allocation5 + %s117]]
      %s119 = sshra.s32 %s54, 7
      %s120 = sand.u32 %s54, 127
      %s121 = sadd.s32 %s119, %s58
      %s122 = smul.u32 %s121, 128
      %s123 = sshra.s32 %s54, 7
      %s124 = sand.u32 %s54, 127
      %s125 = sadd.s32 %s122, %s124
      %s126 = sld [smem:[#allocation5 + %s125]]
      %s127 = ssub.s32 %s46, %s58
      %s128 = ssub.s32 %s118, %s126
      %s129 = sor.u32 %s127, %s128
      %p130 = scmp.eq.s32.totalorder %s129, 0
      %s132 = sadd.s32 %s131, 1
      %s133 = scalar_select %p130, %s131, %s132
      %p136 = pneg %p130
      %p137 = scmp.eq.s32.totalorder %s39, 3
      %p138 = por %p136, %p137
      %p139 = scmp.ne.s32.totalorder %s131, %s134
      %p140 = scmp.eq.s32.totalorder %s39, 0
      %p141 = por %p139, %p140
      %p142 = scmp.ne.s32.totalorder %s131, %s134
      %p143 = scmp.eq.s32.totalorder %s44, 3
      %p144 = por %p142, %p143
      %p145 = scmp.ne.s32.totalorder %s134, %s135
      %p146 = scmp.eq.s32.totalorder %s44, 0
      %p147 = por %p145, %p146
      %p148 = scmp.ne.s32.totalorder %s134, %s135
      %p149 = scmp.eq.s32.totalorder %s45, 3
      %p150 = por %p148, %p149
      %p152 = scmp.ne.s32.totalorder %s135, %s151
      %p153 = scmp.eq.s32.totalorder %s45, 0
      %p154 = por %p152, %p153
      %s155 = sshra.s32 %s47, 7
      %s156 = sand.u32 %s47, 127
      %s157 = sadd.s32 %s155, %s46
      %s158 = smul.u32 %s157, 128
      %s159 = sshra.s32 %s47, 7
      %s160 = sand.u32 %s47, 127
      %s161 = sadd.s32 %s158, %s160
      %s162 = sld [smem:[#allocation5 + %s161]]
      %s163 = sshra.s32 %s54, 7
      %s164 = sand.u32 %s54, 127
      %s165 = sadd.s32 %s163, %s58
      %s166 = smul.u32 %s165, 128
      %s167 = sshra.s32 %s54, 7
      %s168 = sand.u32 %s54, 127
      %s169 = sadd.s32 %s166, %s168
      %s170 = sld [smem:[#allocation5 + %s169]]
      %s171 = ssub.s32 %s162, %s170
      %p172 = scmp.eq.s32.totalorder %s171, 0
      %s174 = sadd.s32 %s173, 1
      %s175 = scalar_select %p172, %s173, %s174
      %p178 = pneg %p172
      %p179 = scmp.eq.s32.totalorder %s39, 3
      %p180 = por %p178, %p179
      %p181 = scmp.ne.s32.totalorder %s173, %s176
      %p182 = scmp.eq.s32.totalorder %s39, 0
      %p183 = por %p181, %p182
      %p184 = scmp.ne.s32.totalorder %s173, %s176
      %p185 = scmp.eq.s32.totalorder %s44, 3
      %p186 = por %p184, %p185
      %p187 = scmp.ne.s32.totalorder %s176, %s177
      %p188 = scmp.eq.s32.totalorder %s44, 0
      %p189 = por %p187, %p188
      %p190 = scmp.ne.s32.totalorder %s176, %s177
      %p191 = scmp.eq.s32.totalorder %s45, 3
      %p192 = por %p190, %p191
      %p194 = scmp.ne.s32.totalorder %s177, %s193
      %p195 = scmp.eq.s32.totalorder %s45, 0
      %p196 = por %p194, %p195
      %s198 = sadd.s32 %s197, 1
      %p201 = scmp.eq.s32.totalorder %s39, 3
      %p202 = scmp.ne.s32.totalorder %s197, %s199
      %p203 = scmp.eq.s32.totalorder %s39, 0
      %p204 = por %p202, %p203
      %p205 = scmp.ne.s32.totalorder %s197, %s199
      %p206 = scmp.eq.s32.totalorder %s44, 3
      %p207 = por %p205, %p206
      %p208 = scmp.ne.s32.totalorder %s199, %s200
      %p209 = scmp.eq.s32.totalorder %s44, 0
      %p210 = por %p208, %p209
      %p211 = scmp.ne.s32.totalorder %s199, %s200
      %p212 = scmp.eq.s32.totalorder %s45, 3
      %p213 = por %p211, %p212
      %p215 = scmp.ne.s32.totalorder %s200, %s214
      %p216 = scmp.eq.s32.totalorder %s45, 0
      %p217 = por %p215, %p216
      %s219 = sadd.s32 %s218, 1
      %p222 = scmp.eq.s32.totalorder %s39, 3
      %p223 = scmp.ne.s32.totalorder %s218, %s220
      %p224 = scmp.eq.s32.totalorder %s39, 0
      %p225 = por %p223, %p224
      %p226 = scmp.ne.s32.totalorder %s218, %s220
      %p227 = scmp.eq.s32.totalorder %s44, 3
      %p228 = por %p226, %p227
      %p229 = scmp.ne.s32.totalorder %s220, %s221
      %p230 = scmp.eq.s32.totalorder %s44, 0
      %p231 = por %p229, %p230
      %p232 = scmp.ne.s32.totalorder %s220, %s221
      %p233 = scmp.eq.s32.totalorder %s45, 3
      %p234 = por %p232, %p233
      %p236 = scmp.ne.s32.totalorder %s221, %s235
      %p237 = scmp.eq.s32.totalorder %s45, 0
      %p238 = por %p236, %p237
      %s240 = sadd.s32 %s239, 1
      %p243 = scmp.eq.s32.totalorder %s39, 3
      %p244 = scmp.ne.s32.totalorder %s239, %s241
      %p245 = scmp.eq.s32.totalorder %s39, 0
      %p246 = por %p244, %p245
      %p247 = scmp.ne.s32.totalorder %s239, %s241
      %p248 = scmp.eq.s32.totalorder %s44, 3
      %p249 = por %p247, %p248
      %p250 = scmp.ne.s32.totalorder %s241, %s242
      %p251 = scmp.eq.s32.totalorder %s44, 0
      %p252 = por %p250, %p251
      %p253 = scmp.ne.s32.totalorder %s241, %s242
      %p254 = scmp.eq.s32.totalorder %s45, 3
      %p255 = por %p253, %p254
      %p257 = scmp.ne.s32.totalorder %s242, %s256
      %p258 = scmp.eq.s32.totalorder %s45, 0
      %p259 = por %p257, %p258
      %s261 = sadd.s32 %s260, 1
      %p264 = scmp.eq.s32.totalorder %s39, 3
      %p265 = scmp.ne.s32.totalorder %s260, %s262
      %p266 = scmp.eq.s32.totalorder %s39, 0
      %p267 = por %p265, %p266
      %p268 = scmp.ne.s32.totalorder %s260, %s262
      %p269 = scmp.eq.s32.totalorder %s44, 3
      %p270 = por %p268, %p269
      %p271 = scmp.ne.s32.totalorder %s262, %s263
      %p272 = scmp.eq.s32.totalorder %s44, 0
      %p273 = por %p271, %p272
      %p274 = scmp.ne.s32.totalorder %s262, %s263
      %p275 = scmp.eq.s32.totalorder %s45, 3
      %p276 = por %p274, %p275
      %p278 = scmp.ne.s32.totalorder %s263, %s277
      %p279 = scmp.eq.s32.totalorder %s45, 0
      %p280 = por %p278, %p279
      %s281 = ssub.s32 %s46, %s58
      %p282 = scmp.eq.s32.totalorder %s281, 0
      %s284 = sadd.s32 %s283, 1
      %s285 = scalar_select %p282, %s283, %s284
      %p288 = pneg %p282
      %p289 = scmp.eq.s32.totalorder %s39, 3
      %p290 = por %p288, %p289
      %p291 = scmp.ne.s32.totalorder %s283, %s286
      %p292 = scmp.eq.s32.totalorder %s39, 0
      %p293 = por %p291, %p292
      %p294 = scmp.ne.s32.totalorder %s283, %s286
      %p295 = scmp.eq.s32.totalorder %s44, 3
      %p296 = por %p294, %p295
      %p297 = scmp.ne.s32.totalorder %s286, %s287
      %p298 = scmp.eq.s32.totalorder %s44, 0
      %p299 = por %p297, %p298
      %p300 = scmp.ne.s32.totalorder %s286, %s287
      %p301 = scmp.eq.s32.totalorder %s45, 3
      %p302 = por %p300, %p301
      %p304 = scmp.ne.s32.totalorder %s287, %s303
      %p305 = scmp.eq.s32.totalorder %s45, 0
      %p306 = por %p304, %p305
      %p307 = scmp.le.s32.totalorder 1, %s39
      %p308 = scmp.lt.s32.totalorder %s39, 5
      %p309 = pnand %p307, %p308
      %p310 = pneg %p309
      // Predicated region
      $region9: #{tpu_custom_call.1} parent=5 // pred_check
        _
      $region10: #{tpu_custom_call.1} parent=5 // pred_check_branch
        %312 = sbr.rel (%p309) target = $region12
      $region11: #{tpu_custom_call.1} parent=5 // pred_region
        %s313 = ssub.s32 %s39, 1
        // Predicated region
        $region13: #{tpu_custom_call.1} parent=11 // pred_check
          %p314 = pneg %p210
        $region14: #{tpu_custom_call.1} parent=11 // pred_check_branch
          %316 = sbr.rel (%p314) target = $region16
        $region15: #{tpu_custom_call.1} parent=11 // pred_region
          %318 = vsyncadd [#allocation10], 0
          %s319 = sshll.u32 %s6, 4
          %s320 = int_to_ptr.hbm [resolvable:$true] %s319
          %s321 = sshll.u32 [#allocation11], 4
          %s322 = int_to_ptr.vmem [resolvable:$true] %s321
          %327 = dma.hbm_to_vmem [thread:$0]  %s320, 2048, %s322, [#allocation10], 128, 128, 8
        $region16: #{tpu_custom_call.1} parent=11 // pred_fallthru
          _
        // Predicated region
        $region17: #{tpu_custom_call.1} parent=11 // pred_check
          %p328 = pneg %p231
        $region18: #{tpu_custom_call.1} parent=11 // pred_check_branch
          %330 = sbr.rel (%p328) target = $region20
        $region19: #{tpu_custom_call.1} parent=11 // pred_region
          %332 = vsyncadd [#allocation13], 0
          %s333 = sshll.u32 %s7, 4
          %s334 = int_to_ptr.hbm [resolvable:$true] %s333
          %s335 = sshll.u32 [#allocation12], 4
          %s336 = int_to_ptr.vmem [resolvable:$true] %s335
          %341 = dma.hbm_to_vmem [thread:$0]  %s334, 2048, %s336, [#allocation13], 128, 128, 8
        $region20: #{tpu_custom_call.1} parent=11 // pred_fallthru
          _
        // Predicated region
        $region21: #{tpu_custom_call.1} parent=11 // pred_check
          %p342 = pneg %p252
        $region22: #{tpu_custom_call.1} parent=11 // pred_check_branch
          %344 = sbr.rel (%p342) target = $region24
        $region23: #{tpu_custom_call.1} parent=11 // pred_region
          _
        $region24: #{tpu_custom_call.1} parent=11 // pred_fallthru
          _
        // Predicated region
        $region25: #{tpu_custom_call.1} parent=11 // pred_check
          %p345 = pneg %p273
        $region26: #{tpu_custom_call.1} parent=11 // pred_check_branch
          %347 = sbr.rel (%p345) target = $region28
        $region27: #{tpu_custom_call.1} parent=11 // pred_region
          _
        $region28: #{tpu_custom_call.1} parent=11 // pred_fallthru
          _
      $region12: #{tpu_custom_call.1} parent=5 // pred_fallthru
        _
      %p348 = scmp.lt.s32.totalorder %s39, 4
      // Predicated region
      $region29: #{tpu_custom_call.1} parent=5 // pred_check
        %p349 = pneg %p348
      $region30: #{tpu_custom_call.1} parent=5 // pred_check_branch
        %351 = sbr.rel (%p349) target = $region32
      $region31: #{tpu_custom_call.1} parent=5 // pred_region
        // Predicated region
        $region33: #{tpu_custom_call.1} parent=31 // pred_check
          %p352 = pneg %p71
        $region34: #{tpu_custom_call.1} parent=31 // pred_check_branch
          %354 = sbr.rel (%p352) target = $region36
        $region35: #{tpu_custom_call.1} parent=31 // pred_region
          %s355 = smul.u32 16, %s46
          %p356 = scmp.lt.s32.totalorder %s355, 31
          %s357 = scalar_select %p356, %s355, 31
          %s358 = smul.addr %s357, 8
          %s359 = scalar_lea.vmem %s2, %s358
          %s360 = smul.u32 16, %s46
        $region36: #{tpu_custom_call.1} parent=31 // pred_fallthru
          _
        // Predicated region
        $region37: #{tpu_custom_call.1} parent=31 // pred_check
          %p361 = pneg %p97
        $region38: #{tpu_custom_call.1} parent=31 // pred_check_branch
          %363 = sbr.rel (%p361) target = $region40
        $region39: #{tpu_custom_call.1} parent=31 // pred_region
          %s364 = smul.u32 16, %s46
          %p365 = scmp.lt.s32.totalorder %s364, 31
          %s366 = scalar_select %p365, %s364, 31
          %s367 = smul.addr %s366, 8
          %s368 = scalar_lea.vmem %s3, %s367
          %s369 = smul.u32 16, %s46
        $region40: #{tpu_custom_call.1} parent=31 // pred_fallthru
          _
        // Predicated region
        $region41: #{tpu_custom_call.1} parent=31 // pred_check
          %p370 = pneg %p141
        $region42: #{tpu_custom_call.1} parent=31 // pred_check_branch
          %372 = sbr.rel (%p370) target = $region44
        $region43: #{tpu_custom_call.1} parent=31 // pred_region
          %s373 = sand.u32 %s131, 1
          %s374 = scalar_lea.sflag [#allocation7], %s373
          %s375 = sand.u32 %s131, 1
          %s376 = smul.addr %s375, 128
          %s377 = scalar_lea.vmem [#allocation6], %s376
          %s378 = sshra.s32 %s47, 7
          %s379 = sand.u32 %s47, 127
          %s380 = sadd.s32 %s378, %s46
          %s381 = smul.u32 %s380, 128
          %s382 = sshra.s32 %s47, 7
          %s383 = sand.u32 %s47, 127
          %s384 = sadd.s32 %s381, %s383
          %s385 = sld [smem:[#allocation5 + %s384]]
          %s386 = smul.u32 16, %s46
          %s387 = smul.u32 2, %s385
          %389 = vsyncadd %s374, 0
          %s390 = smul.addr %s386, 4
          %s391 = sadd.s32 %s387, %s390
          %s392 = smul.addr %s391, 4
          %s393 = scalar_lea.hbm %s4, %s392
          %s394 = sshll.u32 %s393, 4
          %s395 = int_to_ptr.hbm [resolvable:$true] %s394
          %s396 = sshll.u32 %s377, 4
          %s397 = int_to_ptr.vmem [resolvable:$true] %s396
          %402 = dma.hbm_to_vmem [thread:$0]  %s395, 2048, %s397, %s374, 256, 128, 8
        $region44: #{tpu_custom_call.1} parent=31 // pred_fallthru
          _
        // Predicated region
        $region45: #{tpu_custom_call.1} parent=31 // pred_check
          %p403 = pneg %p183
        $region46: #{tpu_custom_call.1} parent=31 // pred_check_branch
          %405 = sbr.rel (%p403) target = $region48
        $region47: #{tpu_custom_call.1} parent=31 // pred_region
          %s406 = sand.u32 %s39, 1
          %s407 = scalar_lea.sflag [#allocation10], %s406
          %s408 = sand.u32 %s173, 1
          %s409 = smul.addr %s408, 128
          %s410 = scalar_lea.vmem [#allocation9], %s409
          %s411 = sshra.s32 %s47, 7
          %s412 = sand.u32 %s47, 127
          %s413 = sadd.s32 %s411, %s46
          %s414 = smul.u32 %s413, 128
          %s415 = sshra.s32 %s47, 7
          %s416 = sand.u32 %s47, 127
          %s417 = sadd.s32 %s414, %s416
          %s418 = sld [smem:[#allocation5 + %s417]]
          %s419 = smul.u32 32, %s418
          %421 = vsyncadd %s407, 0
          %s422 = smul.addr %s419, 4
          %s423 = scalar_lea.hbm %s5, %s422
          %s424 = sshll.u32 %s423, 4
          %s425 = int_to_ptr.hbm [resolvable:$true] %s424
          %s426 = sshll.u32 %s410, 4
          %s427 = int_to_ptr.vmem [resolvable:$true] %s426
          %432 = dma.hbm_to_vmem [thread:$0]  %s425, 2048, %s427, %s407, 64, 64, 4
        $region48: #{tpu_custom_call.1} parent=31 // pred_fallthru
          _
      $region32: #{tpu_custom_call.1} parent=5 // pred_fallthru
        _
      %p433 = scmp.le.s32.totalorder 1, %s39
      %p434 = scmp.lt.s32.totalorder %s39, 5
      %p435 = pnand %p433, %p434
      %p436 = pneg %p435
      // Predicated region
      $region49: #{tpu_custom_call.1} parent=5 // pred_check
        _
      $region50: #{tpu_custom_call.1} parent=5 // pred_check_branch
        %438 = sbr.rel (%p435) target = $region52
      $region51: #{tpu_custom_call.1} parent=5 // pred_region
        %s439 = ssub.s32 %s39, 1
        %s440 = sand.u32 %s134, 1
        %s441 = scalar_lea.sflag [#allocation7], %s440
        %s442 = sand.u32 %s134, 1
        %s443 = smul.addr %s442, 128
        %s444 = scalar_lea.vmem [#allocation6], %s443
        // Predicated region
        $region53: #{tpu_custom_call.1} parent=51 // pred_check
          %p445 = pneg %p147
        $region54: #{tpu_custom_call.1} parent=51 // pred_check_branch
          %447 = sbr.rel (%p445) target = $region56
        $region55: #{tpu_custom_call.1} parent=51 // pred_region
          %449 = dma.done %s441, 2048
        $region56: #{tpu_custom_call.1} parent=51 // pred_fallthru
          _
        %s450 = sand.u32 %s44, 1
        %s451 = scalar_lea.sflag [#allocation10], %s450
        %s452 = sand.u32 %s176, 1
        %s453 = smul.addr %s452, 128
        %s454 = scalar_lea.vmem [#allocation9], %s453
        // Predicated region
        $region57: #{tpu_custom_call.1} parent=51 // pred_check
          %p455 = pneg %p189
        $region58: #{tpu_custom_call.1} parent=51 // pred_check_branch
          %457 = sbr.rel (%p455) target = $region60
        $region59: #{tpu_custom_call.1} parent=51 // pred_region
          %459 = dma.done %s451, 2048
        $region60: #{tpu_custom_call.1} parent=51 // pred_fallthru
          _
        // Predicated region
        $region61: #{tpu_custom_call.1} parent=51 // pred_check
          %p460 = pneg %p210
        $region62: #{tpu_custom_call.1} parent=51 // pred_check_branch
          %462 = sbr.rel (%p460) target = $region64
        $region63: #{tpu_custom_call.1} parent=51 // pred_region
          %464 = dma.done [#allocation10], 2048
        $region64: #{tpu_custom_call.1} parent=51 // pred_fallthru
          _
        // Predicated region
        $region65: #{tpu_custom_call.1} parent=51 // pred_check
          %p465 = pneg %p231
        $region66: #{tpu_custom_call.1} parent=51 // pred_check_branch
          %467 = sbr.rel (%p465) target = $region68
        $region67: #{tpu_custom_call.1} parent=51 // pred_region
          %469 = dma.done [#allocation13], 2048
        $region68: #{tpu_custom_call.1} parent=51 // pred_fallthru
          _
        %s470 = smul.u32 16, %s48
        %p471 = scmp.lt.s32.totalorder %s470, 31
        %s472 = scalar_select %p471, %s470, 31
        %s473 = smul.addr %s472, 8
        %s474 = scalar_lea.vmem %s2, %s473
        %p475 = pneg %p77
        %p476 = pneg %p74
        %s477 = smul.u32 16, %s48
        %p478 = scmp.lt.s32.totalorder %s477, 31
        %s479 = scalar_select %p478, %s477, 31
        %s480 = smul.addr %s479, 8
        %s481 = scalar_lea.vmem %s3, %s480
        %p482 = pneg %p103
        %p483 = pneg %p100
        %s484 = sand.u32 %s134, 1
        %s485 = scalar_lea.sflag [#allocation7], %s484
        %s486 = sand.u32 %s134, 1
        %s487 = smul.addr %s486, 128
        %s488 = scalar_lea.vmem [#allocation6], %s487
        %p489 = pneg %p147
        %p490 = pneg %p144
        %s491 = sand.u32 %s44, 1
        %s492 = scalar_lea.sflag [#allocation10], %s491
        %s493 = sand.u32 %s176, 1
        %s494 = smul.addr %s493, 128
        %s495 = scalar_lea.vmem [#allocation9], %s494
        %p496 = pneg %p189
        %p497 = pneg %p186
        %p498 = pneg %p210
        %p499 = pneg %p207
        %p500 = pneg %p231
        %p501 = pneg %p228
        %p502 = pneg %p252
        %p503 = pneg %p249
        %p504 = pneg %p273
        %p505 = pneg %p270
        %p506 = pneg %p299
        %p507 = pneg %p296
        %s508 = sand.u32 %s286, 1
        %s509 = scalar_lea.sflag [#allocation8], %s508
        %s510 = sand.u32 %s286, 1
        %s511 = smul.addr %s510, 128
        %s512 = scalar_lea.vmem [#allocation14], %s511
        %s513 = smul.u32 16, %s48
        %p514 = scmp.lt.s32.totalorder %s513, 31
        %s515 = scalar_select %p514, %s513, 31
        %s516 = smul.addr %s515, 8
        %s517 = scalar_lea.vmem %s2, %s516
        %s518 = smul.u32 16, %s48
        %s519 = smul.u32 16, %s48
        %p520 = scmp.lt.s32.totalorder %s519, 31
        %s521 = scalar_select %p520, %s519, 31
        %s522 = smul.addr %s521, 8
        %s523 = scalar_lea.vmem %s3, %s522
        %s524 = smul.u32 16, %s48
        %s525 = sshra.s32 %s49, 7
        %s526 = sand.u32 %s49, 127
        %s527 = sadd.s32 %s525, %s48
        %s528 = smul.u32 %s527, 128
        %s529 = sshra.s32 %s49, 7
        %s530 = sand.u32 %s49, 127
        %s531 = sadd.s32 %s528, %s530
        %s532 = sld [smem:[#allocation5 + %s531]]
        %s533 = smul.u32 16, %s48
        %s534 = smul.u32 2, %s532
        %s535 = sshra.s32 %s49, 7
        %s536 = sand.u32 %s49, 127
        %s537 = sadd.s32 %s535, %s48
        %s538 = smul.u32 %s537, 128
        %s539 = sshra.s32 %s49, 7
        %s540 = sand.u32 %s49, 127
        %s541 = sadd.s32 %s538, %s540
        %s542 = sld [smem:[#allocation5 + %s541]]
        %s543 = smul.u32 32, %s542
        %s544 = smul.u32 16, %s48
        %p545 = scmp.eq.s32.totalorder %s49, 0
        // Predicated region
        $region69: #{tpu_custom_call.1} parent=51 // pred_check
          %p546 = pneg %p545
        $region70: #{tpu_custom_call.1} parent=51 // pred_check_branch
          %548 = sbr.rel (%p546) target = $region72
        $region71: #{tpu_custom_call.1} parent=51 // pred_region
          %549 = vst [vmem:[#allocation2] sm:$0xff] 0.0
          %550 = vst [vmem:[#allocation2 + $0x8] sm:$0xff] 0.0
          %551 = vst [vmem:[#allocation2 + $0x10] sm:$0xff] 0.0
          %552 = vst [vmem:[#allocation2 + $0x18] sm:$0xff] 0.0
          %553 = vst [vmem:[#allocation2 + $0x20] sm:$0xff] 0.0
          %554 = vst [vmem:[#allocation2 + $0x28] sm:$0xff] 0.0
          %555 = vst [vmem:[#allocation2 + $0x30] sm:$0xff] 0.0
          %556 = vst [vmem:[#allocation2 + $0x38] sm:$0xff] 0.0
          %557 = vst [vmem:[#allocation2 + $0x40] sm:$0xff] 0.0
          %558 = vst [vmem:[#allocation2 + $0x48] sm:$0xff] 0.0
          %559 = vst [vmem:[#allocation2 + $0x50] sm:$0xff] 0.0
          %560 = vst [vmem:[#allocation2 + $0x58] sm:$0xff] 0.0
          %561 = vst [vmem:[#allocation2 + $0x60] sm:$0xff] 0.0
          %562 = vst [vmem:[#allocation2 + $0x68] sm:$0xff] 0.0
          %563 = vst [vmem:[#allocation2 + $0x70] sm:$0xff] 0.0
          %564 = vst [vmem:[#allocation2 + $0x78] sm:$0xff] 0.0
        $region72: #{tpu_custom_call.1} parent=51 // pred_fallthru
          _
        %s565 = sld [smem:[#allocation4 + %s48]]
        %p566 = scmp.lt.s32.totalorder %s49, %s565
        // Predicated region
        $region73: #{tpu_custom_call.1} parent=51 // pred_check
          %p567 = pneg %p566
        $region74: #{tpu_custom_call.1} parent=51 // pred_check_branch
          %569 = sbr.rel (%p567) target = $region76
        $region75: #{tpu_custom_call.1} parent=51 // pred_region
          %v570 = vld [vmem:[#allocation2] sm:$0xff]
          %v571 = vld [vmem:[#allocation2 + $0x8] sm:$0xff]
          %v572 = vld [vmem:[#allocation2 + $0x10] sm:$0xff]
          %v573 = vld [vmem:[#allocation2 + $0x18] sm:$0xff]
          %v574 = vld [vmem:[#allocation2 + $0x20] sm:$0xff]
          %v575 = vld [vmem:[#allocation2 + $0x28] sm:$0xff]
          %v576 = vld [vmem:[#allocation2 + $0x30] sm:$0xff]
          %v577 = vld [vmem:[#allocation2 + $0x38] sm:$0xff]
          %v578 = vld [vmem:[#allocation2 + $0x40] sm:$0xff]
          %v579 = vld [vmem:[#allocation2 + $0x48] sm:$0xff]
          %v580 = vld [vmem:[#allocation2 + $0x50] sm:$0xff]
          %v581 = vld [vmem:[#allocation2 + $0x58] sm:$0xff]
          %v582 = vld [vmem:[#allocation2 + $0x60] sm:$0xff]
          %v583 = vld [vmem:[#allocation2 + $0x68] sm:$0xff]
          %v584 = vld [vmem:[#allocation2 + $0x70] sm:$0xff]
          %v585 = vld [vmem:[#allocation2 + $0x78] sm:$0xff]
          %v586 = vld [vmem:[%s444] sm:$0xff]
          %v587 = vld [vmem:[%s444 + $0x8] sm:$0xff]
          %v588 = vld [vmem:[%s444 + $0x10] sm:$0xff]
          %v589 = vld [vmem:[%s444 + $0x18] sm:$0xff]
          %v590 = vld [vmem:[%s444 + $0x20] sm:$0xff]
          %v591 = vld [vmem:[%s444 + $0x28] sm:$0xff]
          %v592 = vld [vmem:[%s444 + $0x30] sm:$0xff]
          %v593 = vld [vmem:[%s444 + $0x38] sm:$0xff]
          %v594 = vld [vmem:[%s444 + $0x40] sm:$0xff]
          %v595 = vld [vmem:[%s444 + $0x48] sm:$0xff]
          %v596 = vld [vmem:[%s444 + $0x50] sm:$0xff]
          %v597 = vld [vmem:[%s444 + $0x58] sm:$0xff]
          %v598 = vld [vmem:[%s444 + $0x60] sm:$0xff]
          %v599 = vld [vmem:[%s444 + $0x68] sm:$0xff]
          %v600 = vld [vmem:[%s444 + $0x70] sm:$0xff]
          %v601 = vld [vmem:[%s444 + $0x78] sm:$0xff]
          %v602 = vld [vmem:[%s454] sm:$0xf]
          %v603 = vld [vmem:[%s454 + $0x4] sm:$0xf]
          %v604 = vld [vmem:[%s454 + $0x8] sm:$0xf]
          %v605 = vld [vmem:[%s454 + $0xc] sm:$0xf]
          %v606 = vld [vmem:[%s454 + $0x10] sm:$0xf]
          %v607 = vld [vmem:[%s454 + $0x14] sm:$0xf]
          %v608 = vld [vmem:[%s454 + $0x18] sm:$0xf]
          %v609 = vld [vmem:[%s454 + $0x1c] sm:$0xf]
          %v610 = vld [vmem:[%s454 + $0x20] sm:$0xf]
          %v611 = vld [vmem:[%s454 + $0x24] sm:$0xf]
          %v612 = vld [vmem:[%s454 + $0x28] sm:$0xf]
          %v613 = vld [vmem:[%s454 + $0x2c] sm:$0xf]
          %v614 = vld [vmem:[%s454 + $0x30] sm:$0xf]
          %v615 = vld [vmem:[%s454 + $0x34] sm:$0xf]
          %v616 = vld [vmem:[%s454 + $0x38] sm:$0xf]
          %v617 = vld [vmem:[%s454 + $0x3c] sm:$0xf]
          %v618 = vld [vmem:[%s454 + $0x40] sm:$0xf]
          %v619 = vld [vmem:[%s454 + $0x44] sm:$0xf]
          %v620 = vld [vmem:[%s454 + $0x48] sm:$0xf]
          %v621 = vld [vmem:[%s454 + $0x4c] sm:$0xf]
          %v622 = vld [vmem:[%s454 + $0x50] sm:$0xf]
          %v623 = vld [vmem:[%s454 + $0x54] sm:$0xf]
          %v624 = vld [vmem:[%s454 + $0x58] sm:$0xf]
          %v625 = vld [vmem:[%s454 + $0x5c] sm:$0xf]
          %v626 = vld [vmem:[%s454 + $0x60] sm:$0xf]
          %v627 = vld [vmem:[%s454 + $0x64] sm:$0xf]
          %v628 = vld [vmem:[%s454 + $0x68] sm:$0xf]
          %v629 = vld [vmem:[%s454 + $0x6c] sm:$0xf]
          %v630 = vld [vmem:[%s454 + $0x70] sm:$0xf]
          %v631 = vld [vmem:[%s454 + $0x74] sm:$0xf]
          %v632 = vld [vmem:[%s454 + $0x78] sm:$0xf]
          %v633 = vld [vmem:[%s454 + $0x7c] sm:$0xf]
          %v650 = vunpack.c.l.b16 %v586
          %v651 = vunpack.c.h.b16 %v586
          %v652 = vunpack.c.l.b16 %v587
          %v653 = vunpack.c.h.b16 %v587
          %v654 = vunpack.c.l.b16 %v588
          %v655 = vunpack.c.h.b16 %v588
          %v656 = vunpack.c.l.b16 %v589
          %v657 = vunpack.c.h.b16 %v589
          %v658 = vunpack.c.l.b16 %v590
          %v659 = vunpack.c.h.b16 %v590
          %v660 = vunpack.c.l.b16 %v591
          %v661 = vunpack.c.h.b16 %v591
          %v662 = vunpack.c.l.b16 %v592
          %v663 = vunpack.c.h.b16 %v592
          %v664 = vunpack.c.l.b16 %v593
          %v665 = vunpack.c.h.b16 %v593
          %v666 = vunpack.c.l.b16 %v594
          %v667 = vunpack.c.h.b16 %v594
          %v668 = vunpack.c.l.b16 %v595
          %v669 = vunpack.c.h.b16 %v595
          %v670 = vunpack.c.l.b16 %v596
          %v671 = vunpack.c.h.b16 %v596
          %v672 = vunpack.c.l.b16 %v597
          %v673 = vunpack.c.h.b16 %v597
          %v674 = vunpack.c.l.b16 %v598
          %v675 = vunpack.c.h.b16 %v598
          %v676 = vunpack.c.l.b16 %v599
          %v677 = vunpack.c.h.b16 %v599
          %v678 = vunpack.c.l.b16 %v600
          %v679 = vunpack.c.h.b16 %v600
          %v680 = vunpack.c.l.b16 %v601
          %v681 = vunpack.c.h.b16 %v601
          %v682 = vpack.c.b16 %v652, %v650
          %v683 = vpack.c.b16 %v653, %v651
          %v684 = vpack.c.b16 %v656, %v654
          %v685 = vpack.c.b16 %v657, %v655
          %v686 = vpack.c.b16 %v660, %v658
          %v687 = vpack.c.b16 %v661, %v659
          %v688 = vpack.c.b16 %v664, %v662
          %v689 = vpack.c.b16 %v665, %v663
          %v690 = vpack.c.b16 %v668, %v666
          %v691 = vpack.c.b16 %v669, %v667
          %v692 = vpack.c.b16 %v672, %v670
          %v693 = vpack.c.b16 %v673, %v671
          %v694 = vpack.c.b16 %v676, %v674
          %v695 = vpack.c.b16 %v677, %v675
          %v696 = vpack.c.b16 %v680, %v678
          %v697 = vpack.c.b16 %v681, %v679
          %v746 = vunpack.c.l.b16 %v602
          %v747 = vunpack.c.l.b16 %v603
          %v748 = vunpack.c.l.b16 %v604
          %v749 = vunpack.c.l.b16 %v605
          %v750 = vunpack.c.l.b16 %v606
          %v751 = vunpack.c.l.b16 %v607
          %v752 = vunpack.c.l.b16 %v608
          %v753 = vunpack.c.l.b16 %v609
          %v754 = vunpack.c.l.b16 %v610
          %v755 = vunpack.c.l.b16 %v611
          %v756 = vunpack.c.l.b16 %v612
          %v757 = vunpack.c.l.b16 %v613
          %v758 = vunpack.c.l.b16 %v614
          %v759 = vunpack.c.l.b16 %v615
          %v760 = vunpack.c.l.b16 %v616
          %v761 = vunpack.c.l.b16 %v617
          %v762 = vunpack.c.l.b16 %v618
          %v763 = vunpack.c.l.b16 %v619
          %v764 = vunpack.c.l.b16 %v620
          %v765 = vunpack.c.l.b16 %v621
          %v766 = vunpack.c.l.b16 %v622
          %v767 = vunpack.c.l.b16 %v623
          %v768 = vunpack.c.l.b16 %v624
          %v769 = vunpack.c.l.b16 %v625
          %v770 = vunpack.c.l.b16 %v626
          %v771 = vunpack.c.l.b16 %v627
          %v772 = vunpack.c.l.b16 %v628
          %v773 = vunpack.c.l.b16 %v629
          %v774 = vunpack.c.l.b16 %v630
          %v775 = vunpack.c.l.b16 %v631
          %v776 = vunpack.c.l.b16 %v632
          %v777 = vunpack.c.l.b16 %v633
          %v778 = vpack.c.b16 %v747, %v746
          %v779 = vpack.c.b16 %v749, %v748
          %v780 = vpack.c.b16 %v751, %v750
          %v781 = vpack.c.b16 %v753, %v752
          %v782 = vpack.c.b16 %v755, %v754
          %v783 = vpack.c.b16 %v757, %v756
          %v784 = vpack.c.b16 %v759, %v758
          %v785 = vpack.c.b16 %v761, %v760
          %v786 = vpack.c.b16 %v763, %v762
          %v787 = vpack.c.b16 %v765, %v764
          %v788 = vpack.c.b16 %v767, %v766
          %v789 = vpack.c.b16 %v769, %v768
          %v790 = vpack.c.b16 %v771, %v770
          %v791 = vpack.c.b16 %v773, %v772
          %v792 = vpack.c.b16 %v775, %v774
          %v793 = vpack.c.b16 %v777, %v776
          %810 = vmatpush.bf16.msra.mxu0 %v785
          %811 = vmatpush.bf16.msra.mxu0 %v784
          %812 = vmatpush.bf16.msra.mxu0 %v783
          %813 = vmatpush.bf16.msra.mxu0 %v782
          %814 = vmatpush.bf16.msra.mxu0 %v781
          %815 = vmatpush.bf16.msra.mxu0 %v780
          %816 = vmatpush.bf16.msra.mxu0 %v779
          %817 = vmatpush.bf16.msra.mxu0 %v778
          %818 = vmatmul.bf16.gmra.mxu0 %v682
          %v819 = vpop.f32.mrf.mxu0
          %v820 = vadd.f32 0.0, %v819
          %v821 = vpop.f32.mrf.mxu0
          %v822 = vadd.f32 0.0, %v821
          %823 = vmatmul.bf16.gmra.mxu0 %v684
          %v824 = vpop.f32.mrf.mxu0
          %v825 = vadd.f32 0.0, %v824
          %v826 = vpop.f32.mrf.mxu0
          %v827 = vadd.f32 0.0, %v826
          %828 = vmatmul.bf16.gmra.mxu0 %v686
          %v829 = vpop.f32.mrf.mxu0
          %v830 = vadd.f32 0.0, %v829
          %v831 = vpop.f32.mrf.mxu0
          %v832 = vadd.f32 0.0, %v831
          %833 = vmatmul.bf16.gmra.mxu0 %v688
          %v834 = vpop.f32.mrf.mxu0
          %v835 = vadd.f32 0.0, %v834
          %v836 = vpop.f32.mrf.mxu0
          %v837 = vadd.f32 0.0, %v836
          %838 = vmatmul.bf16.gmra.mxu0 %v690
          %v839 = vpop.f32.mrf.mxu0
          %v840 = vadd.f32 0.0, %v839
          %v841 = vpop.f32.mrf.mxu0
          %v842 = vadd.f32 0.0, %v841
          %843 = vmatmul.bf16.gmra.mxu0 %v692
          %v844 = vpop.f32.mrf.mxu0
          %v845 = vadd.f32 0.0, %v844
          %v846 = vpop.f32.mrf.mxu0
          %v847 = vadd.f32 0.0, %v846
          %848 = vmatmul.bf16.gmra.mxu0 %v694
          %v849 = vpop.f32.mrf.mxu0
          %v850 = vadd.f32 0.0, %v849
          %v851 = vpop.f32.mrf.mxu0
          %v852 = vadd.f32 0.0, %v851
          %853 = vmatmul.bf16.gmra.mxu0 %v696
          %v854 = vpop.f32.mrf.mxu0
          %v855 = vadd.f32 0.0, %v854
          %v856 = vpop.f32.mrf.mxu0
          %v857 = vadd.f32 0.0, %v856
          %858 = vdwg.mxu0
          %859 = vmatpush.bf16.msra.mxu0 %v793
          %860 = vmatpush.bf16.msra.mxu0 %v792
          %861 = vmatpush.bf16.msra.mxu0 %v791
          %862 = vmatpush.bf16.msra.mxu0 %v790
          %863 = vmatpush.bf16.msra.mxu0 %v789
          %864 = vmatpush.bf16.msra.mxu0 %v788
          %865 = vmatpush.bf16.msra.mxu0 %v787
          %866 = vmatpush.bf16.msra.mxu0 %v786
          %867 = vmatmul.bf16.gmra.mxu0 %v683
          %v868 = vpop.f32.mrf.mxu0
          %v869 = vadd.f32 %v820, %v868
          %v870 = vpop.f32.mrf.mxu0
          %v871 = vadd.f32 %v822, %v870
          %872 = vmatmul.bf16.gmra.mxu0 %v685
          %v873 = vpop.f32.mrf.mxu0
          %v874 = vadd.f32 %v825, %v873
          %v875 = vpop.f32.mrf.mxu0
          %v876 = vadd.f32 %v827, %v875
          %877 = vmatmul.bf16.gmra.mxu0 %v687
          %v878 = vpop.f32.mrf.mxu0
          %v879 = vadd.f32 %v830, %v878
          %v880 = vpop.f32.mrf.mxu0
          %v881 = vadd.f32 %v832, %v880
          %882 = vmatmul.bf16.gmra.mxu0 %v689
          %v883 = vpop.f32.mrf.mxu0
          %v884 = vadd.f32 %v835, %v883
          %v885 = vpop.f32.mrf.mxu0
          %v886 = vadd.f32 %v837, %v885
          %887 = vmatmul.bf16.gmra.mxu0 %v691
          %v888 = vpop.f32.mrf.mxu0
          %v889 = vadd.f32 %v840, %v888
          %v890 = vpop.f32.mrf.mxu0
          %v891 = vadd.f32 %v842, %v890
          %892 = vmatmul.bf16.gmra.mxu0 %v693
          %v893 = vpop.f32.mrf.mxu0
          %v894 = vadd.f32 %v845, %v893
          %v895 = vpop.f32.mrf.mxu0
          %v896 = vadd.f32 %v847, %v895
          %897 = vmatmul.bf16.gmra.mxu0 %v695
          %v898 = vpop.f32.mrf.mxu0
          %v899 = vadd.f32 %v850, %v898
          %v900 = vpop.f32.mrf.mxu0
          %v901 = vadd.f32 %v852, %v900
          %902 = vmatmul.bf16.gmra.mxu0 %v697
          %v903 = vpop.f32.mrf.mxu0
          %v904 = vadd.f32 %v855, %v903
          %v905 = vpop.f32.mrf.mxu0
          %v906 = vadd.f32 %v857, %v905
          %907 = vdwg.mxu0
          %v908 = vadd.f32 %v570, %v869
          %v909 = vadd.f32 %v571, %v871
          %v910 = vadd.f32 %v572, %v874
          %v911 = vadd.f32 %v573, %v876
          %v912 = vadd.f32 %v574, %v879
          %v913 = vadd.f32 %v575, %v881
          %v914 = vadd.f32 %v576, %v884
          %v915 = vadd.f32 %v577, %v886
          %v916 = vadd.f32 %v578, %v889
          %v917 = vadd.f32 %v579, %v891
          %v918 = vadd.f32 %v580, %v894
          %v919 = vadd.f32 %v581, %v896
          %v920 = vadd.f32 %v582, %v899
          %v921 = vadd.f32 %v583, %v901
          %v922 = vadd.f32 %v584, %v904
          %v923 = vadd.f32 %v585, %v906
          %924 = vst [vmem:[#allocation2] sm:$0xff] %v908
          %925 = vst [vmem:[#allocation2 + $0x8] sm:$0xff] %v909
          %926 = vst [vmem:[#allocation2 + $0x10] sm:$0xff] %v910
          %927 = vst [vmem:[#allocation2 + $0x18] sm:$0xff] %v911
          %928 = vst [vmem:[#allocation2 + $0x20] sm:$0xff] %v912
          %929 = vst [vmem:[#allocation2 + $0x28] sm:$0xff] %v913
          %930 = vst [vmem:[#allocation2 + $0x30] sm:$0xff] %v914
          %931 = vst [vmem:[#allocation2 + $0x38] sm:$0xff] %v915
          %932 = vst [vmem:[#allocation2 + $0x40] sm:$0xff] %v916
          %933 = vst [vmem:[#allocation2 + $0x48] sm:$0xff] %v917
          %934 = vst [vmem:[#allocation2 + $0x50] sm:$0xff] %v918
          %935 = vst [vmem:[#allocation2 + $0x58] sm:$0xff] %v919
          %936 = vst [vmem:[#allocation2 + $0x60] sm:$0xff] %v920
          %937 = vst [vmem:[#allocation2 + $0x68] sm:$0xff] %v921
          %938 = vst [vmem:[#allocation2 + $0x70] sm:$0xff] %v922
          %939 = vst [vmem:[#allocation2 + $0x78] sm:$0xff] %v923
        $region76: #{tpu_custom_call.1} parent=51 // pred_fallthru
          _
        %p940 = scmp.eq.s32.totalorder %s49, 1
        // Predicated region
        $region77: #{tpu_custom_call.1} parent=51 // pred_check
          %p941 = pneg %p940
        $region78: #{tpu_custom_call.1} parent=51 // pred_check_branch
          %943 = sbr.rel (%p941) target = $region80
        $region79: #{tpu_custom_call.1} parent=51 // pred_region
          %v944 = vld [vmem:[#allocation2] sm:$0xff]
          %v945 = vld [vmem:[#allocation2 + $0x8] sm:$0xff]
          %v946 = vld [vmem:[#allocation2 + $0x10] sm:$0xff]
          %v947 = vld [vmem:[#allocation2 + $0x18] sm:$0xff]
          %v948 = vld [vmem:[#allocation2 + $0x20] sm:$0xff]
          %v949 = vld [vmem:[#allocation2 + $0x28] sm:$0xff]
          %v950 = vld [vmem:[#allocation2 + $0x30] sm:$0xff]
          %v951 = vld [vmem:[#allocation2 + $0x38] sm:$0xff]
          %v952 = vld [vmem:[#allocation2 + $0x40] sm:$0xff]
          %v953 = vld [vmem:[#allocation2 + $0x48] sm:$0xff]
          %v954 = vld [vmem:[#allocation2 + $0x50] sm:$0xff]
          %v955 = vld [vmem:[#allocation2 + $0x58] sm:$0xff]
          %v956 = vld [vmem:[#allocation2 + $0x60] sm:$0xff]
          %v957 = vld [vmem:[#allocation2 + $0x68] sm:$0xff]
          %v958 = vld [vmem:[#allocation2 + $0x70] sm:$0xff]
          %v959 = vld [vmem:[#allocation2 + $0x78] sm:$0xff]
          %v960 = vld [vmem:[%s517] sm:$0xff]
          %v961 = vld [vmem:[%s517 + $0x8] sm:$0xff]
          %v962 = vld [vmem:[%s517 + $0x10] sm:$0xff]
          %v963 = vld [vmem:[%s517 + $0x18] sm:$0xff]
          %v964 = vld [vmem:[%s517 + $0x20] sm:$0xff]
          %v965 = vld [vmem:[%s517 + $0x28] sm:$0xff]
          %v966 = vld [vmem:[%s517 + $0x30] sm:$0xff]
          %v967 = vld [vmem:[%s517 + $0x38] sm:$0xff]
          %v968 = vld [vmem:[%s517 + $0x40] sm:$0xff]
          %v969 = vld [vmem:[%s517 + $0x48] sm:$0xff]
          %v970 = vld [vmem:[%s517 + $0x50] sm:$0xff]
          %v971 = vld [vmem:[%s517 + $0x58] sm:$0xff]
          %v972 = vld [vmem:[%s517 + $0x60] sm:$0xff]
          %v973 = vld [vmem:[%s517 + $0x68] sm:$0xff]
          %v974 = vld [vmem:[%s517 + $0x70] sm:$0xff]
          %v975 = vld [vmem:[%s517 + $0x78] sm:$0xff]
          %v976 = vadd.f32 %v960, %v944
          %v977 = vadd.f32 %v961, %v945
          %v978 = vadd.f32 %v962, %v946
          %v979 = vadd.f32 %v963, %v947
          %v980 = vadd.f32 %v964, %v948
          %v981 = vadd.f32 %v965, %v949
          %v982 = vadd.f32 %v966, %v950
          %v983 = vadd.f32 %v967, %v951
          %v984 = vadd.f32 %v968, %v952
          %v985 = vadd.f32 %v969, %v953
          %v986 = vadd.f32 %v970, %v954
          %v987 = vadd.f32 %v971, %v955
          %v988 = vadd.f32 %v972, %v956
          %v989 = vadd.f32 %v973, %v957
          %v990 = vadd.f32 %v974, %v958
          %v991 = vadd.f32 %v975, %v959
          %v992 = vld [vmem:[#allocation11] sm:$0xff]
          %v993 = vld [vmem:[#allocation11 + $0x8] sm:$0xff]
          %v994 = vld [vmem:[#allocation11 + $0x10] sm:$0xff]
          %v995 = vld [vmem:[#allocation11 + $0x18] sm:$0xff]
          %v996 = vld [vmem:[#allocation11 + $0x20] sm:$0xff]
          %v997 = vld [vmem:[#allocation11 + $0x28] sm:$0xff]
          %v998 = vld [vmem:[#allocation11 + $0x30] sm:$0xff]
          %v999 = vld [vmem:[#allocation11 + $0x38] sm:$0xff]
          %v1000 = vld [vmem:[#allocation11 + $0x40] sm:$0xff]
          %v1001 = vld [vmem:[#allocation11 + $0x48] sm:$0xff]
          %v1002 = vld [vmem:[#allocation11 + $0x50] sm:$0xff]
          %v1003 = vld [vmem:[#allocation11 + $0x58] sm:$0xff]
          %v1004 = vld [vmem:[#allocation11 + $0x60] sm:$0xff]
          %v1005 = vld [vmem:[#allocation11 + $0x68] sm:$0xff]
          %v1006 = vld [vmem:[#allocation11 + $0x70] sm:$0xff]
          %v1007 = vld [vmem:[#allocation11 + $0x78] sm:$0xff]
          %v1008 = vmul.f32 %v944, %v960
          %v1009 = vmul.f32 %v945, %v961
          %v1010 = vmul.f32 %v946, %v962
          %v1011 = vmul.f32 %v947, %v963
          %v1012 = vmul.f32 %v948, %v964
          %v1013 = vmul.f32 %v949, %v965
          %v1014 = vmul.f32 %v950, %v966
          %v1015 = vmul.f32 %v951, %v967
          %v1016 = vmul.f32 %v952, %v968
          %v1017 = vmul.f32 %v953, %v969
          %v1018 = vmul.f32 %v954, %v970
          %v1019 = vmul.f32 %v955, %v971
          %v1020 = vmul.f32 %v956, %v972
          %v1021 = vmul.f32 %v957, %v973
          %v1022 = vmul.f32 %v958, %v974
          %v1023 = vmul.f32 %v959, %v975
          %v1024 = vld [vmem:[#allocation12] sm:$0xff]
          %v1025 = vld [vmem:[#allocation12 + $0x8] sm:$0xff]
          %v1026 = vld [vmem:[#allocation12 + $0x10] sm:$0xff]
          %v1027 = vld [vmem:[#allocation12 + $0x18] sm:$0xff]
          %v1028 = vld [vmem:[#allocation12 + $0x20] sm:$0xff]
          %v1029 = vld [vmem:[#allocation12 + $0x28] sm:$0xff]
          %v1030 = vld [vmem:[#allocation12 + $0x30] sm:$0xff]
          %v1031 = vld [vmem:[#allocation12 + $0x38] sm:$0xff]
          %v1032 = vld [vmem:[#allocation12 + $0x40] sm:$0xff]
          %v1033 = vld [vmem:[#allocation12 + $0x48] sm:$0xff]
          %v1034 = vld [vmem:[#allocation12 + $0x50] sm:$0xff]
          %v1035 = vld [vmem:[#allocation12 + $0x58] sm:$0xff]
          %v1036 = vld [vmem:[#allocation12 + $0x60] sm:$0xff]
          %v1037 = vld [vmem:[#allocation12 + $0x68] sm:$0xff]
          %v1038 = vld [vmem:[#allocation12 + $0x70] sm:$0xff]
          %v1039 = vld [vmem:[#allocation12 + $0x78] sm:$0xff]
          %1040 = vmatpush.msra.mxu0 %v1039
          %1041 = vmatpush.msra.mxu0 %v1038
          %1042 = vmatpush.msra.mxu0 %v1037
          %1043 = vmatpush.msra.mxu0 %v1036
          %1044 = vmatpush.msra.mxu0 %v1035
          %1045 = vmatpush.msra.mxu0 %v1034
          %1046 = vmatpush.msra.mxu0 %v1033
          %1047 = vmatpush.msra.mxu0 %v1032
          %1048 = vmatpush.msra.mxu0 %v1031
          %1049 = vmatpush.msra.mxu0 %v1030
          %1050 = vmatpush.msra.mxu0 %v1029
          %1051 = vmatpush.msra.mxu0 %v1028
          %1052 = vmatpush.msra.mxu0 %v1027
          %1053 = vmatpush.msra.mxu0 %v1026
          %1054 = vmatpush.msra.mxu0 %v1025
          %1055 = vmatpush.msra.mxu0 %v1024
          %1056 = vmatmul.f32.gmra.mxu0 %v1008
          %v1057 = vpop.f32.mrf.mxu0
          %v1058 = vadd.f32 0.0, %v1057
          %1059 = vmatmul.f32.gmra.mxu0 %v1009
          %v1060 = vpop.f32.mrf.mxu0
          %v1061 = vadd.f32 0.0, %v1060
          %1062 = vmatmul.f32.gmra.mxu0 %v1010
          %v1063 = vpop.f32.mrf.mxu0
          %v1064 = vadd.f32 0.0, %v1063
          %1065 = vmatmul.f32.gmra.mxu0 %v1011
          %v1066 = vpop.f32.mrf.mxu0
          %v1067 = vadd.f32 0.0, %v1066
          %1068 = vmatmul.f32.gmra.mxu0 %v1012
          %v1069 = vpop.f32.mrf.mxu0
          %v1070 = vadd.f32 0.0, %v1069
          %1071 = vmatmul.f32.gmra.mxu0 %v1013
          %v1072 = vpop.f32.mrf.mxu0
          %v1073 = vadd.f32 0.0, %v1072
          %1074 = vmatmul.f32.gmra.mxu0 %v1014
          %v1075 = vpop.f32.mrf.mxu0
          %v1076 = vadd.f32 0.0, %v1075
          %1077 = vmatmul.f32.gmra.mxu0 %v1015
          %v1078 = vpop.f32.mrf.mxu0
          %v1079 = vadd.f32 0.0, %v1078
          %1080 = vmatmul.f32.gmra.mxu0 %v1016
          %v1081 = vpop.f32.mrf.mxu0
          %v1082 = vadd.f32 0.0, %v1081
          %1083 = vmatmul.f32.gmra.mxu0 %v1017
          %v1084 = vpop.f32.mrf.mxu0
          %v1085 = vadd.f32 0.0, %v1084
          %1086 = vmatmul.f32.gmra.mxu0 %v1018
          %v1087 = vpop.f32.mrf.mxu0
          %v1088 = vadd.f32 0.0, %v1087
          %1089 = vmatmul.f32.gmra.mxu0 %v1019
          %v1090 = vpop.f32.mrf.mxu0
          %v1091 = vadd.f32 0.0, %v1090
          %1092 = vmatmul.f32.gmra.mxu0 %v1020
          %v1093 = vpop.f32.mrf.mxu0
          %v1094 = vadd.f32 0.0, %v1093
          %1095 = vmatmul.f32.gmra.mxu0 %v1021
          %v1096 = vpop.f32.mrf.mxu0
          %v1097 = vadd.f32 0.0, %v1096
          %1098 = vmatmul.f32.gmra.mxu0 %v1022
          %v1099 = vpop.f32.mrf.mxu0
          %v1100 = vadd.f32 0.0, %v1099
          %1101 = vmatmul.f32.gmra.mxu0 %v1023
          %v1102 = vpop.f32.mrf.mxu0
          %v1103 = vadd.f32 0.0, %v1102
          %1104 = vdwg.mxu0
          %1105 = vmatpush.msra.mxu0 %v1007
          %1106 = vmatpush.msra.mxu0 %v1006
          %1107 = vmatpush.msra.mxu0 %v1005
          %1108 = vmatpush.msra.mxu0 %v1004
          %1109 = vmatpush.msra.mxu0 %v1003
          %1110 = vmatpush.msra.mxu0 %v1002
          %1111 = vmatpush.msra.mxu0 %v1001
          %1112 = vmatpush.msra.mxu0 %v1000
          %1113 = vmatpush.msra.mxu0 %v999
          %1114 = vmatpush.msra.mxu0 %v998
          %1115 = vmatpush.msra.mxu0 %v997
          %1116 = vmatpush.msra.mxu0 %v996
          %1117 = vmatpush.msra.mxu0 %v995
          %1118 = vmatpush.msra.mxu0 %v994
          %1119 = vmatpush.msra.mxu0 %v993
          %1120 = vmatpush.msra.mxu0 %v992
          %1121 = vmatmul.f32.gmra.mxu0 %v976
          %v1122 = vpop.f32.mrf.mxu0
          %v1123 = vadd.f32 %v1058, %v1122
          %1124 = vmatmul.f32.gmra.mxu0 %v977
          %v1125 = vpop.f32.mrf.mxu0
          %v1126 = vadd.f32 %v1061, %v1125
          %1127 = vmatmul.f32.gmra.mxu0 %v978
          %v1128 = vpop.f32.mrf.mxu0
          %v1129 = vadd.f32 %v1064, %v1128
          %1130 = vmatmul.f32.gmra.mxu0 %v979
          %v1131 = vpop.f32.mrf.mxu0
          %v1132 = vadd.f32 %v1067, %v1131
          %1133 = vmatmul.f32.gmra.mxu0 %v980
          %v1134 = vpop.f32.mrf.mxu0
          %v1135 = vadd.f32 %v1070, %v1134
          %1136 = vmatmul.f32.gmra.mxu0 %v981
          %v1137 = vpop.f32.mrf.mxu0
          %v1138 = vadd.f32 %v1073, %v1137
          %1139 = vmatmul.f32.gmra.mxu0 %v982
          %v1140 = vpop.f32.mrf.mxu0
          %v1141 = vadd.f32 %v1076, %v1140
          %1142 = vmatmul.f32.gmra.mxu0 %v983
          %v1143 = vpop.f32.mrf.mxu0
          %v1144 = vadd.f32 %v1079, %v1143
          %1145 = vmatmul.f32.gmra.mxu0 %v984
          %v1146 = vpop.f32.mrf.mxu0
          %v1147 = vadd.f32 %v1082, %v1146
          %1148 = vmatmul.f32.gmra.mxu0 %v985
          %v1149 = vpop.f32.mrf.mxu0
          %v1150 = vadd.f32 %v1085, %v1149
          %1151 = vmatmul.f32.gmra.mxu0 %v986
          %v1152 = vpop.f32.mrf.mxu0
          %v1153 = vadd.f32 %v1088, %v1152
          %1154 = vmatmul.f32.gmra.mxu0 %v987
          %v1155 = vpop.f32.mrf.mxu0
          %v1156 = vadd.f32 %v1091, %v1155
          %1157 = vmatmul.f32.gmra.mxu0 %v988
          %v1158 = vpop.f32.mrf.mxu0
          %v1159 = vadd.f32 %v1094, %v1158
          %1160 = vmatmul.f32.gmra.mxu0 %v989
          %v1161 = vpop.f32.mrf.mxu0
          %v1162 = vadd.f32 %v1097, %v1161
          %1163 = vmatmul.f32.gmra.mxu0 %v990
          %v1164 = vpop.f32.mrf.mxu0
          %v1165 = vadd.f32 %v1100, %v1164
          %1166 = vmatmul.f32.gmra.mxu0 %v991
          %v1167 = vpop.f32.mrf.mxu0
          %v1168 = vadd.f32 %v1103, %v1167
          %1169 = vdwg.mxu0
          %v1170 = vld [vmem:[%s8] sm:$0x1]
          %v1172 = vperm.slane %v1170, 0
          %v1174 = vadd.f32 %v1123, %v1172
          %v1175 = vadd.f32 %v1126, %v1172
          %v1176 = vadd.f32 %v1129, %v1172
          %v1177 = vadd.f32 %v1132, %v1172
          %v1178 = vadd.f32 %v1135, %v1172
          %v1179 = vadd.f32 %v1138, %v1172
          %v1180 = vadd.f32 %v1141, %v1172
          %v1181 = vadd.f32 %v1144, %v1172
          %v1182 = vadd.f32 %v1147, %v1172
          %v1183 = vadd.f32 %v1150, %v1172
          %v1184 = vadd.f32 %v1153, %v1172
          %v1185 = vadd.f32 %v1156, %v1172
          %v1186 = vadd.f32 %v1159, %v1172
          %v1187 = vadd.f32 %v1162, %v1172
          %v1188 = vadd.f32 %v1165, %v1172
          %v1189 = vadd.f32 %v1168, %v1172
          %v1190 = vld [vmem:[%s523] sm:$0xff]
          %v1191 = vld [vmem:[%s523 + $0x8] sm:$0xff]
          %v1192 = vld [vmem:[%s523 + $0x10] sm:$0xff]
          %v1193 = vld [vmem:[%s523 + $0x18] sm:$0xff]
          %v1194 = vld [vmem:[%s523 + $0x20] sm:$0xff]
          %v1195 = vld [vmem:[%s523 + $0x28] sm:$0xff]
          %v1196 = vld [vmem:[%s523 + $0x30] sm:$0xff]
          %v1197 = vld [vmem:[%s523 + $0x38] sm:$0xff]
          %v1198 = vld [vmem:[%s523 + $0x40] sm:$0xff]
          %v1199 = vld [vmem:[%s523 + $0x48] sm:$0xff]
          %v1200 = vld [vmem:[%s523 + $0x50] sm:$0xff]
          %v1201 = vld [vmem:[%s523 + $0x58] sm:$0xff]
          %v1202 = vld [vmem:[%s523 + $0x60] sm:$0xff]
          %v1203 = vld [vmem:[%s523 + $0x68] sm:$0xff]
          %v1204 = vld [vmem:[%s523 + $0x70] sm:$0xff]
          %v1205 = vld [vmem:[%s523 + $0x78] sm:$0xff]
          %v1206 = vld [vmem:[%s9] sm:$0x1]
          %1208 = vset.pattern.permute.xlu0 0
          %1209 = vperm.xlu0 %1208, %v1190
          %v1210 = vpop.permute.xlu0 %1209
          %1213 = vset.pattern.permute.xlu0 0
          %1214 = vperm.xlu0 %1213, %v1191
          %v1215 = vpop.permute.xlu0 %1214
          %1218 = vset.pattern.permute.xlu0 0
          %1219 = vperm.xlu0 %1218, %v1192
          %v1220 = vpop.permute.xlu0 %1219
          %1223 = vset.pattern.permute.xlu0 0
          %1224 = vperm.xlu0 %1223, %v1193
          %v1225 = vpop.permute.xlu0 %1224
          %1228 = vset.pattern.permute.xlu0 0
          %1229 = vperm.xlu0 %1228, %v1194
          %v1230 = vpop.permute.xlu0 %1229
          %1233 = vset.pattern.permute.xlu0 0
          %1234 = vperm.xlu0 %1233, %v1195
          %v1235 = vpop.permute.xlu0 %1234
          %1238 = vset.pattern.permute.xlu0 0
          %1239 = vperm.xlu0 %1238, %v1196
          %v1240 = vpop.permute.xlu0 %1239
          %1243 = vset.pattern.permute.xlu0 0
          %1244 = vperm.xlu0 %1243, %v1197
          %v1245 = vpop.permute.xlu0 %1244
          %1248 = vset.pattern.permute.xlu0 0
          %1249 = vperm.xlu0 %1248, %v1198
          %v1250 = vpop.permute.xlu0 %1249
          %1253 = vset.pattern.permute.xlu0 0
          %1254 = vperm.xlu0 %1253, %v1199
          %v1255 = vpop.permute.xlu0 %1254
          %1258 = vset.pattern.permute.xlu0 0
          %1259 = vperm.xlu0 %1258, %v1200
          %v1260 = vpop.permute.xlu0 %1259
          %1263 = vset.pattern.permute.xlu0 0
          %1264 = vperm.xlu0 %1263, %v1201
          %v1265 = vpop.permute.xlu0 %1264
          %1268 = vset.pattern.permute.xlu0 0
          %1269 = vperm.xlu0 %1268, %v1202
          %v1270 = vpop.permute.xlu0 %1269
          %1273 = vset.pattern.permute.xlu0 0
          %1274 = vperm.xlu0 %1273, %v1203
          %v1275 = vpop.permute.xlu0 %1274
          %1278 = vset.pattern.permute.xlu0 0
          %1279 = vperm.xlu0 %1278, %v1204
          %v1280 = vpop.permute.xlu0 %1279
          %1283 = vset.pattern.permute.xlu0 0
          %1284 = vperm.xlu0 %1283, %v1205
          %v1285 = vpop.permute.xlu0 %1284
          %v1288 = vperm.slane %v1206, 0
          %v1290 = vmul.f32 %v1210, %v1288
          %v1291 = vmul.f32 %v1215, %v1288
          %v1292 = vmul.f32 %v1220, %v1288
          %v1293 = vmul.f32 %v1225, %v1288
          %v1294 = vmul.f32 %v1230, %v1288
          %v1295 = vmul.f32 %v1235, %v1288
          %v1296 = vmul.f32 %v1240, %v1288
          %v1297 = vmul.f32 %v1245, %v1288
          %v1298 = vmul.f32 %v1250, %v1288
          %v1299 = vmul.f32 %v1255, %v1288
          %v1300 = vmul.f32 %v1260, %v1288
          %v1301 = vmul.f32 %v1265, %v1288
          %v1302 = vmul.f32 %v1270, %v1288
          %v1303 = vmul.f32 %v1275, %v1288
          %v1304 = vmul.f32 %v1280, %v1288
          %v1305 = vmul.f32 %v1285, %v1288
          %v1306 = vadd.f32 %v1174, %v1290
          %v1307 = vadd.f32 %v1175, %v1291
          %v1308 = vadd.f32 %v1176, %v1292
          %v1309 = vadd.f32 %v1177, %v1293
          %v1310 = vadd.f32 %v1178, %v1294
          %v1311 = vadd.f32 %v1179, %v1295
          %v1312 = vadd.f32 %v1180, %v1296
          %v1313 = vadd.f32 %v1181, %v1297
          %v1314 = vadd.f32 %v1182, %v1298
          %v1315 = vadd.f32 %v1183, %v1299
          %v1316 = vadd.f32 %v1184, %v1300
          %v1317 = vadd.f32 %v1185, %v1301
          %v1318 = vadd.f32 %v1186, %v1302
          %v1319 = vadd.f32 %v1187, %v1303
          %v1320 = vadd.f32 %v1188, %v1304
          %v1321 = vadd.f32 %v1189, %v1305
          %vm1322 = vcmp.gt.f32.partialorder %v1306, 0.0
          %vm1323 = vcmp.gt.f32.partialorder %v1307, 0.0
          %vm1324 = vcmp.gt.f32.partialorder %v1308, 0.0
          %vm1325 = vcmp.gt.f32.partialorder %v1309, 0.0
          %vm1326 = vcmp.gt.f32.partialorder %v1310, 0.0
          %vm1327 = vcmp.gt.f32.partialorder %v1311, 0.0
          %vm1328 = vcmp.gt.f32.partialorder %v1312, 0.0
          %vm1329 = vcmp.gt.f32.partialorder %v1313, 0.0
          %vm1330 = vcmp.gt.f32.partialorder %v1314, 0.0
          %vm1331 = vcmp.gt.f32.partialorder %v1315, 0.0
          %vm1332 = vcmp.gt.f32.partialorder %v1316, 0.0
          %vm1333 = vcmp.gt.f32.partialorder %v1317, 0.0
          %vm1334 = vcmp.gt.f32.partialorder %v1318, 0.0
          %vm1335 = vcmp.gt.f32.partialorder %v1319, 0.0
          %vm1336 = vcmp.gt.f32.partialorder %v1320, 0.0
          %vm1337 = vcmp.gt.f32.partialorder %v1321, 0.0
          %v1338 = vmul.f32 %v1306, 0.2
          %v1339 = vmul.f32 %v1307, 0.2
          %v1340 = vmul.f32 %v1308, 0.2
          %v1341 = vmul.f32 %v1309, 0.2
          %v1342 = vmul.f32 %v1310, 0.2
          %v1343 = vmul.f32 %v1311, 0.2
          %v1344 = vmul.f32 %v1312, 0.2
          %v1345 = vmul.f32 %v1313, 0.2
          %v1346 = vmul.f32 %v1314, 0.2
          %v1347 = vmul.f32 %v1315, 0.2
          %v1348 = vmul.f32 %v1316, 0.2
          %v1349 = vmul.f32 %v1317, 0.2
          %v1350 = vmul.f32 %v1318, 0.2
          %v1351 = vmul.f32 %v1319, 0.2
          %v1352 = vmul.f32 %v1320, 0.2
          %v1353 = vmul.f32 %v1321, 0.2
          %v1354 = vsel %vm1322, %v1306, %v1338
          %v1355 = vsel %vm1323, %v1307, %v1339
          %v1356 = vsel %vm1324, %v1308, %v1340
          %v1357 = vsel %vm1325, %v1309, %v1341
          %v1358 = vsel %vm1326, %v1310, %v1342
          %v1359 = vsel %vm1327, %v1311, %v1343
          %v1360 = vsel %vm1328, %v1312, %v1344
          %v1361 = vsel %vm1329, %v1313, %v1345
          %v1362 = vsel %vm1330, %v1314, %v1346
          %v1363 = vsel %vm1331, %v1315, %v1347
          %v1364 = vsel %vm1332, %v1316, %v1348
          %v1365 = vsel %vm1333, %v1317, %v1349
          %v1366 = vsel %vm1334, %v1318, %v1350
          %v1367 = vsel %vm1335, %v1319, %v1351
          %v1368 = vsel %vm1336, %v1320, %v1352
          %v1369 = vsel %vm1337, %v1321, %v1353
          %v1370 = vmul.f32 %v1354, %v1354
          %v1371 = vmul.f32 %v1355, %v1355
          %v1372 = vmul.f32 %v1356, %v1356
          %v1373 = vmul.f32 %v1357, %v1357
          %v1374 = vmul.f32 %v1358, %v1358
          %v1375 = vmul.f32 %v1359, %v1359
          %v1376 = vmul.f32 %v1360, %v1360
          %v1377 = vmul.f32 %v1361, %v1361
          %v1378 = vmul.f32 %v1362, %v1362
          %v1379 = vmul.f32 %v1363, %v1363
          %v1380 = vmul.f32 %v1364, %v1364
          %v1381 = vmul.f32 %v1365, %v1365
          %v1382 = vmul.f32 %v1366, %v1366
          %v1383 = vmul.f32 %v1367, %v1367
          %v1384 = vmul.f32 %v1368, %v1368
          %v1385 = vmul.f32 %v1369, %v1369
          %1386 = vadd.xlane.f32.xlu0 %v1370
          %v1387 = vpop.xlane.xlu0 %1386
          %1388 = vadd.xlane.f32.xlu0 %v1371
          %v1389 = vpop.xlane.xlu0 %1388
          %1390 = vadd.xlane.f32.xlu0 %v1372
          %v1391 = vpop.xlane.xlu0 %1390
          %1392 = vadd.xlane.f32.xlu0 %v1373
          %v1393 = vpop.xlane.xlu0 %1392
          %1394 = vadd.xlane.f32.xlu0 %v1374
          %v1395 = vpop.xlane.xlu0 %1394
          %1396 = vadd.xlane.f32.xlu0 %v1375
          %v1397 = vpop.xlane.xlu0 %1396
          %1398 = vadd.xlane.f32.xlu0 %v1376
          %v1399 = vpop.xlane.xlu0 %1398
          %1400 = vadd.xlane.f32.xlu0 %v1377
          %v1401 = vpop.xlane.xlu0 %1400
          %1402 = vadd.xlane.f32.xlu0 %v1378
          %v1403 = vpop.xlane.xlu0 %1402
          %1404 = vadd.xlane.f32.xlu0 %v1379
          %v1405 = vpop.xlane.xlu0 %1404
          %1406 = vadd.xlane.f32.xlu0 %v1380
          %v1407 = vpop.xlane.xlu0 %1406
          %1408 = vadd.xlane.f32.xlu0 %v1381
          %v1409 = vpop.xlane.xlu0 %1408
          %1410 = vadd.xlane.f32.xlu0 %v1382
          %v1411 = vpop.xlane.xlu0 %1410
          %1412 = vadd.xlane.f32.xlu0 %v1383
          %v1413 = vpop.xlane.xlu0 %1412
          %1414 = vadd.xlane.f32.xlu0 %v1384
          %v1415 = vpop.xlane.xlu0 %1414
          %1416 = vadd.xlane.f32.xlu0 %v1385
          %v1417 = vpop.xlane.xlu0 %1416
          %v1418 = vmax.f32 %v1387, 1e-24
          %v1419 = vmax.f32 %v1389, 1e-24
          %v1420 = vmax.f32 %v1391, 1e-24
          %v1421 = vmax.f32 %v1393, 1e-24
          %v1422 = vmax.f32 %v1395, 1e-24
          %v1423 = vmax.f32 %v1397, 1e-24
          %v1424 = vmax.f32 %v1399, 1e-24
          %v1425 = vmax.f32 %v1401, 1e-24
          %v1426 = vmax.f32 %v1403, 1e-24
          %v1427 = vmax.f32 %v1405, 1e-24
          %v1428 = vmax.f32 %v1407, 1e-24
          %v1429 = vmax.f32 %v1409, 1e-24
          %v1430 = vmax.f32 %v1411, 1e-24
          %v1431 = vmax.f32 %v1413, 1e-24
          %v1432 = vmax.f32 %v1415, 1e-24
          %v1433 = vmax.f32 %v1417, 1e-24
          %v1434 = vrsqrt.pop %v1418
          %v1435 = vmul.f32 %v1434, %v1418
          %v1436 = vmul.f32 %v1435, %v1434
          %v1437 = vmul.f32 0.5, %v1436
          %v1438 = vsub.f32 1.5, %v1437
          %v1439 = vmul.f32 %v1434, %v1438
          %vm1440 = vweird.f32 %v1418
          %vm1441 = vweird.f32 %v1434
          %vm1442 = vmor %vm1440, %vm1441
          %v1443 = vsel %vm1442, %v1434, %v1439
          %v1444 = vrsqrt.pop %v1419
          %v1445 = vmul.f32 %v1444, %v1419
          %v1446 = vmul.f32 %v1445, %v1444
          %v1447 = vmul.f32 0.5, %v1446
          %v1448 = vsub.f32 1.5, %v1447
          %v1449 = vmul.f32 %v1444, %v1448
          %vm1450 = vweird.f32 %v1419
          %vm1451 = vweird.f32 %v1444
          %vm1452 = vmor %vm1450, %vm1451
          %v1453 = vsel %vm1452, %v1444, %v1449
          %v1454 = vrsqrt.pop %v1420
          %v1455 = vmul.f32 %v1454, %v1420
          %v1456 = vmul.f32 %v1455, %v1454
          %v1457 = vmul.f32 0.5, %v1456
          %v1458 = vsub.f32 1.5, %v1457
          %v1459 = vmul.f32 %v1454, %v1458
          %vm1460 = vweird.f32 %v1420
          %vm1461 = vweird.f32 %v1454
          %vm1462 = vmor %vm1460, %vm1461
          %v1463 = vsel %vm1462, %v1454, %v1459
          %v1464 = vrsqrt.pop %v1421
          %v1465 = vmul.f32 %v1464, %v1421
          %v1466 = vmul.f32 %v1465, %v1464
          %v1467 = vmul.f32 0.5, %v1466
          %v1468 = vsub.f32 1.5, %v1467
          %v1469 = vmul.f32 %v1464, %v1468
          %vm1470 = vweird.f32 %v1421
          %vm1471 = vweird.f32 %v1464
          %vm1472 = vmor %vm1470, %vm1471
          %v1473 = vsel %vm1472, %v1464, %v1469
          %v1474 = vrsqrt.pop %v1422
          %v1475 = vmul.f32 %v1474, %v1422
          %v1476 = vmul.f32 %v1475, %v1474
          %v1477 = vmul.f32 0.5, %v1476
          %v1478 = vsub.f32 1.5, %v1477
          %v1479 = vmul.f32 %v1474, %v1478
          %vm1480 = vweird.f32 %v1422
          %vm1481 = vweird.f32 %v1474
          %vm1482 = vmor %vm1480, %vm1481
          %v1483 = vsel %vm1482, %v1474, %v1479
          %v1484 = vrsqrt.pop %v1423
          %v1485 = vmul.f32 %v1484, %v1423
          %v1486 = vmul.f32 %v1485, %v1484
          %v1487 = vmul.f32 0.5, %v1486
          %v1488 = vsub.f32 1.5, %v1487
          %v1489 = vmul.f32 %v1484, %v1488
          %vm1490 = vweird.f32 %v1423
          %vm1491 = vweird.f32 %v1484
          %vm1492 = vmor %vm1490, %vm1491
          %v1493 = vsel %vm1492, %v1484, %v1489
          %v1494 = vrsqrt.pop %v1424
          %v1495 = vmul.f32 %v1494, %v1424
          %v1496 = vmul.f32 %v1495, %v1494
          %v1497 = vmul.f32 0.5, %v1496
          %v1498 = vsub.f32 1.5, %v1497
          %v1499 = vmul.f32 %v1494, %v1498
          %vm1500 = vweird.f32 %v1424
          %vm1501 = vweird.f32 %v1494
          %vm1502 = vmor %vm1500, %vm1501
          %v1503 = vsel %vm1502, %v1494, %v1499
          %v1504 = vrsqrt.pop %v1425
          %v1505 = vmul.f32 %v1504, %v1425
          %v1506 = vmul.f32 %v1505, %v1504
          %v1507 = vmul.f32 0.5, %v1506
          %v1508 = vsub.f32 1.5, %v1507
          %v1509 = vmul.f32 %v1504, %v1508
          %vm1510 = vweird.f32 %v1425
          %vm1511 = vweird.f32 %v1504
          %vm1512 = vmor %vm1510, %vm1511
          %v1513 = vsel %vm1512, %v1504, %v1509
          %v1514 = vrsqrt.pop %v1426
          %v1515 = vmul.f32 %v1514, %v1426
          %v1516 = vmul.f32 %v1515, %v1514
          %v1517 = vmul.f32 0.5, %v1516
          %v1518 = vsub.f32 1.5, %v1517
          %v1519 = vmul.f32 %v1514, %v1518
          %vm1520 = vweird.f32 %v1426
          %vm1521 = vweird.f32 %v1514
          %vm1522 = vmor %vm1520, %vm1521
          %v1523 = vsel %vm1522, %v1514, %v1519
          %v1524 = vrsqrt.pop %v1427
          %v1525 = vmul.f32 %v1524, %v1427
          %v1526 = vmul.f32 %v1525, %v1524
          %v1527 = vmul.f32 0.5, %v1526
          %v1528 = vsub.f32 1.5, %v1527
          %v1529 = vmul.f32 %v1524, %v1528
          %vm1530 = vweird.f32 %v1427
          %vm1531 = vweird.f32 %v1524
          %vm1532 = vmor %vm1530, %vm1531
          %v1533 = vsel %vm1532, %v1524, %v1529
          %v1534 = vrsqrt.pop %v1428
          %v1535 = vmul.f32 %v1534, %v1428
          %v1536 = vmul.f32 %v1535, %v1534
          %v1537 = vmul.f32 0.5, %v1536
          %v1538 = vsub.f32 1.5, %v1537
          %v1539 = vmul.f32 %v1534, %v1538
          %vm1540 = vweird.f32 %v1428
          %vm1541 = vweird.f32 %v1534
          %vm1542 = vmor %vm1540, %vm1541
          %v1543 = vsel %vm1542, %v1534, %v1539
          %v1544 = vrsqrt.pop %v1429
          %v1545 = vmul.f32 %v1544, %v1429
          %v1546 = vmul.f32 %v1545, %v1544
          %v1547 = vmul.f32 0.5, %v1546
          %v1548 = vsub.f32 1.5, %v1547
          %v1549 = vmul.f32 %v1544, %v1548
          %vm1550 = vweird.f32 %v1429
          %vm1551 = vweird.f32 %v1544
          %vm1552 = vmor %vm1550, %vm1551
          %v1553 = vsel %vm1552, %v1544, %v1549
          %v1554 = vrsqrt.pop %v1430
          %v1555 = vmul.f32 %v1554, %v1430
          %v1556 = vmul.f32 %v1555, %v1554
          %v1557 = vmul.f32 0.5, %v1556
          %v1558 = vsub.f32 1.5, %v1557
          %v1559 = vmul.f32 %v1554, %v1558
          %vm1560 = vweird.f32 %v1430
          %vm1561 = vweird.f32 %v1554
          %vm1562 = vmor %vm1560, %vm1561
          %v1563 = vsel %vm1562, %v1554, %v1559
          %v1564 = vrsqrt.pop %v1431
          %v1565 = vmul.f32 %v1564, %v1431
          %v1566 = vmul.f32 %v1565, %v1564
          %v1567 = vmul.f32 0.5, %v1566
          %v1568 = vsub.f32 1.5, %v1567
          %v1569 = vmul.f32 %v1564, %v1568
          %vm1570 = vweird.f32 %v1431
          %vm1571 = vweird.f32 %v1564
          %vm1572 = vmor %vm1570, %vm1571
          %v1573 = vsel %vm1572, %v1564, %v1569
          %v1574 = vrsqrt.pop %v1432
          %v1575 = vmul.f32 %v1574, %v1432
          %v1576 = vmul.f32 %v1575, %v1574
          %v1577 = vmul.f32 0.5, %v1576
          %v1578 = vsub.f32 1.5, %v1577
          %v1579 = vmul.f32 %v1574, %v1578
          %vm1580 = vweird.f32 %v1432
          %vm1581 = vweird.f32 %v1574
          %vm1582 = vmor %vm1580, %vm1581
          %v1583 = vsel %vm1582, %v1574, %v1579
          %v1584 = vrsqrt.pop %v1433
          %v1585 = vmul.f32 %v1584, %v1433
          %v1586 = vmul.f32 %v1585, %v1584
          %v1587 = vmul.f32 0.5, %v1586
          %v1588 = vsub.f32 1.5, %v1587
          %v1589 = vmul.f32 %v1584, %v1588
          %vm1590 = vweird.f32 %v1433
          %vm1591 = vweird.f32 %v1584
          %vm1592 = vmor %vm1590, %vm1591
          %v1593 = vsel %vm1592, %v1584, %v1589
          %v1594 = vmul.f32 %v1354, %v1443
          %v1595 = vmul.f32 %v1355, %v1453
          %v1596 = vmul.f32 %v1356, %v1463
          %v1597 = vmul.f32 %v1357, %v1473
          %v1598 = vmul.f32 %v1358, %v1483
          %v1599 = vmul.f32 %v1359, %v1493
          %v1600 = vmul.f32 %v1360, %v1503
          %v1601 = vmul.f32 %v1361, %v1513
          %v1602 = vmul.f32 %v1362, %v1523
          %v1603 = vmul.f32 %v1363, %v1533
          %v1604 = vmul.f32 %v1364, %v1543
          %v1605 = vmul.f32 %v1365, %v1553
          %v1606 = vmul.f32 %v1366, %v1563
          %v1607 = vmul.f32 %v1367, %v1573
          %v1608 = vmul.f32 %v1368, %v1583
          %v1609 = vmul.f32 %v1369, %v1593
          %1610 = vst [vmem:[%s512] sm:$0xff] %v1594
          %1611 = vst [vmem:[%s512 + $0x8] sm:$0xff] %v1595
          %1612 = vst [vmem:[%s512 + $0x10] sm:$0xff] %v1596
          %1613 = vst [vmem:[%s512 + $0x18] sm:$0xff] %v1597
          %1614 = vst [vmem:[%s512 + $0x20] sm:$0xff] %v1598
          %1615 = vst [vmem:[%s512 + $0x28] sm:$0xff] %v1599
          %1616 = vst [vmem:[%s512 + $0x30] sm:$0xff] %v1600
          %1617 = vst [vmem:[%s512 + $0x38] sm:$0xff] %v1601
          %1618 = vst [vmem:[%s512 + $0x40] sm:$0xff] %v1602
          %1619 = vst [vmem:[%s512 + $0x48] sm:$0xff] %v1603
          %1620 = vst [vmem:[%s512 + $0x50] sm:$0xff] %v1604
          %1621 = vst [vmem:[%s512 + $0x58] sm:$0xff] %v1605
          %1622 = vst [vmem:[%s512 + $0x60] sm:$0xff] %v1606
          %1623 = vst [vmem:[%s512 + $0x68] sm:$0xff] %v1607
          %1624 = vst [vmem:[%s512 + $0x70] sm:$0xff] %v1608
          %1625 = vst [vmem:[%s512 + $0x78] sm:$0xff] %v1609
        $region80: #{tpu_custom_call.1} parent=51 // pred_fallthru
          _
        %s1626 = sand.u32 %s286, 1
        %s1627 = scalar_lea.sflag [#allocation8], %s1626
        %s1628 = sand.u32 %s286, 1
        %s1629 = smul.addr %s1628, 128
        %s1630 = scalar_lea.vmem [#allocation14], %s1629
        // Predicated region
        $region81: #{tpu_custom_call.1} parent=51 // pred_check
          %p1631 = pneg %p296
        $region82: #{tpu_custom_call.1} parent=51 // pred_check_branch
          %1633 = sbr.rel (%p1631) target = $region84
        $region83: #{tpu_custom_call.1} parent=51 // pred_region
          %s1634 = smul.u32 16, %s48
          %1636 = vsyncadd %s1627, 0
          %s1637 = smul.addr %s1634, 8
          %s1638 = scalar_lea.hbm %s10, %s1637
          %s1639 = sshll.u32 %s1630, 4
          %s1640 = int_to_ptr.vmem [resolvable:$true] %s1639
          %s1641 = sshll.u32 %s1638, 4
          %s1642 = int_to_ptr.hbm [resolvable:$true] %s1641
          %1647 = dma.vmem_to_hbm [thread:$0]  %s1640, 2048, %s1642, %s1627, 128, 128, 8
        $region84: #{tpu_custom_call.1} parent=51 // pred_fallthru
          _
      $region52: #{tpu_custom_call.1} parent=5 // pred_fallthru
        _
      %p1648 = scmp.le.s32.totalorder 2, %s39
      // Predicated region
      $region85: #{tpu_custom_call.1} parent=5 // pred_check
        %p1649 = pneg %p1648
      $region86: #{tpu_custom_call.1} parent=5 // pred_check_branch
        %1651 = sbr.rel (%p1649) target = $region88
      $region87: #{tpu_custom_call.1} parent=5 // pred_region
        %s1652 = ssub.s32 %s39, 2
        // Predicated region
        $region89: #{tpu_custom_call.1} parent=87 // pred_check
          %p1653 = pneg %p302
        $region90: #{tpu_custom_call.1} parent=87 // pred_check_branch
          %1655 = sbr.rel (%p1653) target = $region92
        $region91: #{tpu_custom_call.1} parent=87 // pred_region
          %s1656 = sand.u32 %s287, 1
          %s1657 = scalar_lea.sflag [#allocation8], %s1656
          %s1658 = sand.u32 %s287, 1
          %s1659 = smul.addr %s1658, 128
          %s1660 = scalar_lea.vmem [#allocation14], %s1659
          %1662 = dma.done %s1657, 2048
        $region92: #{tpu_custom_call.1} parent=87 // pred_fallthru
          _
      $region88: #{tpu_custom_call.1} parent=5 // pred_fallthru
        _
    $region6: #{tpu_custom_call.1} parent=1 // loop_footer
      %s43 = sadd.s32 1, %s39
    $region7: #{tpu_custom_call.1} parent=1 // loop_footer_branch
      %38 = sbr.rel target = $region3
    $region8: #{tpu_custom_call.1} parent=1 // loop_exit
      _
    %1663 = vsyncpa [#allocation7], 1
    %s1664 = scalar_lea.sflag [#allocation7], 1
    %1665 = vsyncpa %s1664, 1
    %1666 = vsyncpa [#allocation10], 1
    %s1667 = scalar_lea.sflag [#allocation10], 1
    %1668 = vsyncpa %s1667, 1
    %1669 = vsyncpa [#allocation13], 1
    %1670 = vsyncpa [#allocation8], 1
    %s1671 = scalar_lea.sflag [#allocation8], 1
    %1672 = vsyncpa %s1671, 1

</llo_original>
